<compile_context>
chip_gen: v7x
topology: tpu7x:2x2x1
jax: 0.10.0
libtpu: 0.0.40
codegen_flags: <defaults>
</compile_context>

<pallas_src>
import functools
import math

import jax
import jax.numpy as jnp
from jax.experimental import pallas as pl
from jax.experimental.pallas import tpu as pltpu

_BF16 = jnp.bfloat16


# --------------------------- fused 3x3 conv kernel --------------------------- #

def _conv_block_kernel(*refs, n_in, cins, h, w, second, slope):
    """(1- or 2-input) 3x3 conv + LeakyReLU [+ fused second 3x3 conv + LeakyReLU].

    All refs are 2-D.  Inputs are spatially-flattened NHWC images (M = h*w rows,
    channels on lanes).  Each 3x3 conv is 9 shifted matmuls:
        tap(dy, dx)[m] = x[m + (dy-1)*w + (dx-1)]
    with zeros outside the image: vertical overflow handled by zero-filled
    shifts, horizontal wrap handled by precomputed column masks.
    """
    m = h * w
    it = iter(refs)
    x_refs = [next(it) for _ in range(n_in)]      # (m, cin_t)   bf16
    m_dx0_ref = next(it)                          # (m, 1) bf16: 0 where col == w-1
    m_dx2_ref = next(it)                          # (m, 1) bf16: 0 where col == 0
    w1_refs = [next(it) for _ in range(n_in)]     # (9*cin_t, cmid) bf16
    b1_ref = next(it)                             # (1, cmid) f32
    if second:
        w2_ref = next(it)                         # (9*cmid, cout) bf16
        b2_ref = next(it)                         # (1, cout) f32
    o_ref = next(it)                              # (m, cout) bf16

    m_dx0 = m_dx0_ref[...]
    m_dx2 = m_dx2_ref[...]

    def shift(v, s):
        # out[i] = v[i + s] if 0 <= i + s < m else 0
        if s == 0:
            return v
        z = jnp.zeros((abs(s), v.shape[-1]), v.dtype)
        if s > 0:
            return jnp.concatenate([v[s:, :], z], axis=0)
        return jnp.concatenate([z, v[:m + s, :]], axis=0)

    def conv3x3(xs, w_list, cs):
        acc = None
        for x, w_ref, cin in zip(xs, w_list, cs):
            srcs = {1: x}
            if w > 1:
                srcs[0] = x * m_dx0   # dx=0 taps must never read source col w-1
                srcs[2] = x * m_dx2   # dx=2 taps must never read source col 0
            for dy in range(3):
                if h == 1 and dy != 1:
                    continue          # no vertical neighbors for a 1-row image
                for dx in range(3):
                    if dx not in srcs:
                        continue      # no horizontal neighbors for a 1-col image
                    s = (dy - 1) * w + (dx - 1)
                    if abs(s) >= m:
                        continue      # tap lies fully outside the image
                    k = dy * 3 + dx
                    tap = shift(srcs[dx], s)
                    contrib = jnp.dot(tap, w_ref[k * cin:(k + 1) * cin, :],
                                      preferred_element_type=jnp.float32)
                    acc = contrib if acc is None else acc + contrib
        return acc

    y = conv3x3([r[...] for r in x_refs], w1_refs, cins) + b1_ref[...]
    y = jnp.where(y >= 0.0, y, y * slope)                     # f32 epilogue
    if second:
        cmid = y.shape[-1]
        y = conv3x3([y.astype(_BF16)], [w2_ref], (cmid,)) + b2_ref[...]
        y = jnp.where(y >= 0.0, y, y * slope)
    o_ref[...] = y.astype(o_ref.dtype)


def _col_masks(h, w):
    col = jnp.arange(h * w, dtype=jnp.int32) % w
    m_dx0 = (col != (w - 1)).astype(_BF16).reshape(h * w, 1)
    m_dx2 = (col != 0).astype(_BF16).reshape(h * w, 1)
    return m_dx0, m_dx2


def conv_block(inputs, weights, bias1, second=None, slope=0.1):
    """Fused [1- or 2-input] 3x3 conv + LeakyReLU (+ optional second 3x3 conv).

    inputs : list of NHWC arrays sharing (N, H, W).
    weights: list of HWIO (3, 3, cin_t, cmid) arrays (one per input).
    bias1  : (cmid,).
    second : optional (HWIO (3, 3, cmid, cout), (cout,)) for a fused 2nd conv.
    Returns an NHWC bf16 array of shape (N, H, W, cout_final).
    """
    N, H, W, _ = inputs[0].shape
    M = H * W
    n_in = len(inputs)
    cins = tuple(int(x.shape[-1]) for x in inputs)
    cmid = int(weights[0].shape[-1])

    xs = [x.astype(_BF16).reshape(N, M, c) for x, c in zip(inputs, cins)]
    m_dx0, m_dx2 = _col_masks(H, W)
    w1 = [w.reshape(9 * c, cmid).astype(_BF16) for w, c in zip(weights, cins)]
    b1 = bias1.reshape(1, cmid).astype(jnp.float32)

    args = xs + [m_dx0, m_dx2] + w1 + [b1]
    in_specs = ([pl.BlockSpec((None, M, c), lambda n: (n, 0, 0)) for c in cins]
                + [pl.BlockSpec((M, 1), lambda n: (0, 0))] * 2
                + [pl.BlockSpec((9 * c, cmid), lambda n: (0, 0)) for c in cins]
                + [pl.BlockSpec((1, cmid), lambda n: (0, 0))])

    cout = cmid
    flops = 2 * N * M * 9 * sum(cins) * cmid
    if second is not None:
        w2, b2 = second
        cout = int(w2.shape[-1])
        args += [w2.reshape(9 * cmid, cout).astype(_BF16),
                 b2.reshape(1, cout).astype(jnp.float32)]
        in_specs += [pl.BlockSpec((9 * cmid, cout), lambda n: (0, 0)),
                     pl.BlockSpec((1, cout), lambda n: (0, 0))]
        flops += 2 * N * M * 9 * cmid * cout
    bytes_accessed = int(sum(a.size * a.dtype.itemsize for a in args)
                         + N * M * cout * 2)

    out = pl.pallas_call(
        functools.partial(_conv_block_kernel, n_in=n_in, cins=cins, h=H, w=W,
                          second=second is not None, slope=slope),
        out_shape=jax.ShapeDtypeStruct((N, M, cout), _BF16),
        grid=(N,),
        in_specs=in_specs,
        out_specs=pl.BlockSpec((None, M, cout), lambda n: (n, 0, 0)),
        compiler_params=pltpu.CompilerParams(
            dimension_semantics=("parallel",),
            vmem_limit_bytes=32 * 1024 * 1024),
        cost_estimate=pl.CostEstimate(flops=flops, transcendentals=0,
                                      bytes_accessed=bytes_accessed),
    )(*args)
    # TODO(synk): row-tile the conv grid (halo fetch) for large spatial sizes;
    # one full image per grid step assumes H*W*C activations fit in VMEM.
    return out.reshape(N, H, W, cout)


# ----------------------- fused 1x1 output-block kernel ----------------------- #

def _output_block_kernel(x_ref, w1_ref, b1_ref, w2_ref, b2_ref, w3_ref, b3_ref,
                         o_ref, *, slope):
    dt = x_ref.dtype
    h1 = jnp.dot(x_ref[...], w1_ref[...],
                 preferred_element_type=jnp.float32) + b1_ref[...]
    h1 = jnp.where(h1 >= 0.0, h1, h1 * slope).astype(dt)
    h2 = jnp.dot(h1, w2_ref[...],
                 preferred_element_type=jnp.float32) + b2_ref[...]
    h2 = jnp.where(h2 >= 0.0, h2, h2 * slope).astype(dt)
    y = jnp.dot(h2, w3_ref[...],
                preferred_element_type=jnp.float32) + b3_ref[...]
    o_ref[...] = y.astype(o_ref.dtype)        # output conv: no activation


def _pick_tile(m, target=512):
    if m <= target:
        return m
    best = 1
    for t in range(target, 0, -1):
        if m % t == 0:
            if t % 8 == 0:
                return t
            best = max(best, t)
    return best if best >= 8 else m


def output_block(x_nhwc, wb1, wb2, wb3, slope=0.1):
    """Fused 1x1 convs: (96->96 lrelu) -> (96->96 lrelu) -> (96->out, linear)."""
    N, H, W, C = x_nhwc.shape
    M = N * H * W
    tm = _pick_tile(M)

    def prep(wb):
        wgt, b = wb
        ci, co = int(wgt.shape[-2]), int(wgt.shape[-1])
        return (wgt.reshape(ci, co).astype(_BF16),
                b.reshape(1, co).astype(jnp.float32))

    w1, b1 = prep(wb1)
    w2, b2 = prep(wb2)
    w3, b3 = prep(wb3)
    cout = int(w3.shape[-1])
    x2 = x_nhwc.astype(_BF16).reshape(M, C)

    flops = 2 * M * (C * w1.shape[1] + w1.shape[1] * w2.shape[1]
                     + w2.shape[1] * cout)
    bytes_accessed = int(x2.size * 2 + (w1.size + w2.size + w3.size) * 2
                         + M * cout * 4)
    y = pl.pallas_call(
        functools.partial(_output_block_kernel, slope=slope),
        out_shape=jax.ShapeDtypeStruct((M, cout), jnp.float32),
        grid=(M // tm,),
        in_specs=[pl.BlockSpec((tm, C), lambda i: (i, 0)),
                  pl.BlockSpec(w1.shape, lambda i: (0, 0)),
                  pl.BlockSpec(b1.shape, lambda i: (0, 0)),
                  pl.BlockSpec(w2.shape, lambda i: (0, 0)),
                  pl.BlockSpec(b2.shape, lambda i: (0, 0)),
                  pl.BlockSpec(w3.shape, lambda i: (0, 0)),
                  pl.BlockSpec(b3.shape, lambda i: (0, 0))],
        out_specs=pl.BlockSpec((tm, cout), lambda i: (i, 0)),
        compiler_params=pltpu.CompilerParams(
            dimension_semantics=("parallel",),
            vmem_limit_bytes=32 * 1024 * 1024),
        cost_estimate=pl.CostEstimate(flops=flops, transcendentals=0,
                                      bytes_accessed=bytes_accessed),
    )(x2, w1, b1, w2, b2, w3, b3)
    return y.reshape(N, H, W, cout)


# --------------------------- XLA glue (pool / upsample) ----------------------- #

def maxpool2(x):   # nn.MaxPool2d(2)
    n, h, w, c = x.shape
    return x.reshape(n, h // 2, 2, w // 2, 2, c).max(axis=(2, 4))


def upsample2(x):  # nn.Upsample(scale_factor=2, mode='nearest')
    return jnp.repeat(jnp.repeat(x, 2, axis=1), 2, axis=2)


# ------------------------------ parameters ----------------------------------- #

def _kaiming(key, shape, a=0.1, linear=False):
    # shape = (kh, kw, cin, cout) HWIO; fan_in = kh*kw*cin (matches PyTorch fan_in)
    kh, kw, cin, _ = shape
    fan_in = kh * kw * cin
    gain = 1.0 if linear else math.sqrt(2.0 / (1.0 + a * a))
    std = gain / math.sqrt(fan_in)
    return (std * jax.random.normal(key, shape)).astype(jnp.float32)


def init_params(key, in_channels=60, out_channels=2, zero_output_weights=False):
    specs = {
        "e1a": (3, 3, in_channels, 48), "e1b": (3, 3, 48, 48),
        "e2": (3, 3, 48, 48), "e3": (3, 3, 48, 48),
        "e4": (3, 3, 48, 48), "e5": (3, 3, 48, 48), "e6": (3, 3, 48, 48),
        "d5a": (3, 3, 96, 96), "d5b": (3, 3, 96, 96),
        "d4a": (3, 3, 144, 96), "d4b": (3, 3, 96, 96),
        "d3a": (3, 3, 144, 96), "d3b": (3, 3, 96, 96),
        "d2a": (3, 3, 144, 96), "d2b": (3, 3, 96, 96),
        "d1a": (3, 3, 96 + in_channels, 96), "d1b": (3, 3, 96, 96),
        "ob1": (1, 1, 96, 96), "ob2": (1, 1, 96, 96),
        "oc": (1, 1, 96, out_channels),
    }
    params = {}
    keys = jax.random.split(key, len(specs))
    for k, (name, shape) in zip(keys, specs.items()):
        if name == "oc":
            wgt = (jnp.zeros(shape, jnp.float32) if zero_output_weights
                   else _kaiming(k, shape, linear=True))
        else:
            wgt = _kaiming(k, shape, a=0.1)
        params[name] = (wgt, jnp.zeros((shape[-1],), jnp.float32))
    return params


# ------------------------------- forward ------------------------------------- #

def noise_network_forward(params, x_nchw):
    p = params
    x = jnp.transpose(x_nchw, (0, 2, 3, 1))          # NCHW -> NHWC

    def enc(inp, wb):                                # single conv + LeakyReLU
        wgt, b = wb
        return conv_block([inp], [wgt], b)

    def enc_pair(inp, wb_a, wb_b):                   # fused conv pair
        wgt, b = wb_a
        return conv_block([inp], [wgt], b, second=wb_b)

    def dec(up, skip, wb_a, wb_b):                   # fused skip-concat + conv pair
        wgt, b = wb_a
        c_up = int(up.shape[-1])
        return conv_block([up, skip],
                          [wgt[:, :, :c_up, :], wgt[:, :, c_up:, :]],
                          b, second=wb_b)

    pool1 = maxpool2(enc_pair(x, p["e1a"], p["e1b"]))
    pool2 = maxpool2(enc(pool1, p["e2"]))
    pool3 = maxpool2(enc(pool2, p["e3"]))
    pool4 = maxpool2(enc(pool3, p["e4"]))
    pool5 = maxpool2(enc(pool4, p["e5"]))
    encoded = enc(pool5, p["e6"])

    d5 = dec(upsample2(encoded), pool4, p["d5a"], p["d5b"])
    d4 = dec(upsample2(d5), pool3, p["d4a"], p["d4b"])
    d3 = dec(upsample2(d4), pool2, p["d3a"], p["d3b"])
    d2 = dec(upsample2(d3), pool1, p["d2a"], p["d2b"])
    d1 = dec(upsample2(d2), x, p["d1a"], p["d1b"])

    y = output_block(d1, p["ob1"], p["ob2"], p["oc"])
    return jnp.transpose(y, (0, 3, 1, 2))            # NHWC -> NCHW


# -------------------------------- main ---------------------------------------- #

if __name__ == "__main__":
    IC, OC = 4, 2          # small in/out channels (module default is 60 -> 2)
    N, H, W = 2, 32, 32    # H, W must be multiples of 2**5 (five maxpools)

    key = jax.random.PRNGKey(0)
    pkey, xkey, ckey = jax.random.split(key, 3)
    params = init_params(pkey, in_channels=IC, out_channels=OC)
    x = jax.random.normal(xkey, (N, IC, H, W), dtype=jnp.float32)

    # Sanity: fused Pallas conv3x3 + LeakyReLU vs a lax reference with the same
    # bf16-rounded operands (accumulation in f32 on both sides).
    k1, k2 = jax.random.split(ckey)
    xt = jax.random.normal(k1, (1, 8, 8, 5), dtype=jnp.float32)
    wt = _kaiming(k2, (3, 3, 5, 7))
    bt = jnp.arange(7, dtype=jnp.float32) * 0.01
    got = conv_block([xt], [wt], bt).astype(jnp.float32)
    xb = xt.astype(_BF16).astype(jnp.float32)
    wb = wt.astype(_BF16).astype(jnp.float32)
    ref = jax.lax.conv_general_dilated(
        xb, wb, (1, 1), "SAME",
        dimension_numbers=("NHWC", "HWIO", "NHWC"),
        precision=jax.lax.Precision.HIGHEST) + bt
    ref = jnp.where(ref >= 0, ref, 0.1 * ref)
    assert jnp.allclose(got, ref, atol=2e-2, rtol=2e-2), \
        float(jnp.max(jnp.abs(got - ref)))

    out = jax.jit(noise_network_forward)(params, x)
    out = jax.block_until_ready(out)
    assert out.shape == (N, OC, H, W)
    assert bool(jnp.all(jnp.isfinite(out)))
    print("KERNEL_OK")
</pallas_src>

<mosaic_0001>
module attributes {stable_mosaic.version = 11 : i64} {
  func.func @_conv_block_kernel(%arg0: i32, %arg1: memref<1x64x5xbf16, #tpu.memory_space<vmem>>, %arg2: memref<64x1xbf16, #tpu.memory_space<vmem>>, %arg3: memref<64x1xbf16, #tpu.memory_space<vmem>>, %arg4: memref<45x7xbf16, #tpu.memory_space<vmem>>, %arg5: memref<1x7xf32, #tpu.memory_space<vmem>>, %arg6: memref<1x64x7xbf16, #tpu.memory_space<vmem>>) attributes {dimension_semantics = [#tpu.dimension_semantics<parallel>], iteration_bounds = array<i64: 1>, scalar_prefetch = 0 : i64, scratch_operands = 0 : i64, tpu.core_type = #tpu.core_type<tc>, window_params = [{transform_indices = @transform_0, window_bounds = array<i64: 1, 64, 5>}, {pipeline_mode = #tpu.pipeline_mode<synchronous>, transform_indices = @transform_1, window_bounds = array<i64: 64, 1>}, {pipeline_mode = #tpu.pipeline_mode<synchronous>, transform_indices = @transform_2, window_bounds = array<i64: 64, 1>}, {pipeline_mode = #tpu.pipeline_mode<synchronous>, transform_indices = @transform_3, window_bounds = array<i64: 45, 7>}, {pipeline_mode = #tpu.pipeline_mode<synchronous>, transform_indices = @transform_4, window_bounds = array<i64: 1, 7>}, {transform_indices = @transform_5, window_bounds = array<i64: 1, 64, 7>}]} {
    %c0 = arith.constant 0 : index
    %c0_0 = arith.constant 0 : index
    %0 = vector.load %arg2[%c0, %c0_0] : memref<64x1xbf16, #tpu.memory_space<vmem>>, vector<64x1xbf16>
    %c0_1 = arith.constant 0 : index
    %c0_2 = arith.constant 0 : index
    %1 = vector.load %arg3[%c0_1, %c0_2] : memref<64x1xbf16, #tpu.memory_space<vmem>>, vector<64x1xbf16>
    %c0_3 = arith.constant 0 : index
    %c0_4 = arith.constant 0 : index
    %c0_5 = arith.constant 0 : index
    %2 = vector.load %arg1[%c0_3, %c0_4, %c0_5] : memref<1x64x5xbf16, #tpu.memory_space<vmem>>, vector<1x64x5xbf16>
    %3 = vector.shape_cast %2 : vector<1x64x5xbf16> to vector<64x5xbf16>
    %4 = vector.broadcast %0 : vector<64x1xbf16> to vector<64x5xbf16>
    %5 = arith.mulf %3, %4 : vector<64x5xbf16>
    %6 = vector.broadcast %1 : vector<64x1xbf16> to vector<64x5xbf16>
    %7 = arith.mulf %3, %6 : vector<64x5xbf16>
    %cst = arith.constant 0.000000e+00 : bf16
    %8 = vector.broadcast %cst : bf16 to vector<9x5xbf16>
    %9 = vector.extract_strided_slice %5 {offsets = [0, 0], sizes = [55, 5], strides = [1, 1]} : vector<64x5xbf16> to vector<55x5xbf16>
    %10 = tpu.concatenate %8, %9 in 0 : vector<9x5xbf16>, vector<55x5xbf16> -> vector<64x5xbf16>
    %c0_6 = arith.constant 0 : index
    %c0_7 = arith.constant 0 : index
    %11 = vector.load %arg4[%c0_6, %c0_7] : memref<45x7xbf16, #tpu.memory_space<vmem>>, vector<5x7xbf16>
    %cst_8 = arith.constant dense<0.000000e+00> : vector<64x7xf32>
    %12 = tpu.matmul %10, %11, %cst_8 {dimension_numbers = #tpu.dot_dimension_numbers<[1], [0], [0], [1], [0, 0, 1, 1], [], []>} : vector<64x5xbf16>, vector<5x7xbf16>, vector<64x7xf32> -> vector<64x7xf32>
    %cst_9 = arith.constant 0.000000e+00 : bf16
    %13 = vector.broadcast %cst_9 : bf16 to vector<8x5xbf16>
    %14 = vector.extract_strided_slice %3 {offsets = [0, 0], sizes = [56, 5], strides = [1, 1]} : vector<64x5xbf16> to vector<56x5xbf16>
    %15 = tpu.concatenate %13, %14 in 0 : vector<8x5xbf16>, vector<56x5xbf16> -> vector<64x5xbf16>
    %c5 = arith.constant 5 : index
    %c0_10 = arith.constant 0 : index
    %16 = vector.load %arg4[%c5, %c0_10] : memref<45x7xbf16, #tpu.memory_space<vmem>>, vector<5x7xbf16>
    %cst_11 = arith.constant dense<0.000000e+00> : vector<64x7xf32>
    %17 = tpu.matmul %15, %16, %cst_11 {dimension_numbers = #tpu.dot_dimension_numbers<[1], [0], [0], [1], [0, 0, 1, 1], [], []>} : vector<64x5xbf16>, vector<5x7xbf16>, vector<64x7xf32> -> vector<64x7xf32>
    %18 = arith.addf %12, %17 : vector<64x7xf32>
    %cst_12 = arith.constant 0.000000e+00 : bf16
    %19 = vector.broadcast %cst_12 : bf16 to vector<7x5xbf16>
    %20 = vector.extract_strided_slice %7 {offsets = [0, 0], sizes = [57, 5], strides = [1, 1]} : vector<64x5xbf16> to vector<57x5xbf16>
    %21 = tpu.concatenate %19, %20 in 0 : vector<7x5xbf16>, vector<57x5xbf16> -> vector<64x5xbf16>
    %c10 = arith.constant 10 : index
    %c0_13 = arith.constant 0 : index
    %22 = vector.load %arg4[%c10, %c0_13] : memref<45x7xbf16, #tpu.memory_space<vmem>>, vector<5x7xbf16>
    %cst_14 = arith.constant dense<0.000000e+00> : vector<64x7xf32>
    %23 = tpu.matmul %21, %22, %cst_14 {dimension_numbers = #tpu.dot_dimension_numbers<[1], [0], [0], [1], [0, 0, 1, 1], [], []>} : vector<64x5xbf16>, vector<5x7xbf16>, vector<64x7xf32> -> vector<64x7xf32>
    %24 = arith.addf %18, %23 : vector<64x7xf32>
    %cst_15 = arith.constant 0.000000e+00 : bf16
    %25 = vector.broadcast %cst_15 : bf16 to vector<1x5xbf16>
    %26 = vector.extract_strided_slice %5 {offsets = [0, 0], sizes = [63, 5], strides = [1, 1]} : vector<64x5xbf16> to vector<63x5xbf16>
    %27 = tpu.concatenate %25, %26 in 0 : vector<1x5xbf16>, vector<63x5xbf16> -> vector<64x5xbf16>
    %c15 = arith.constant 15 : index
    %c0_16 = arith.constant 0 : index
    %28 = vector.load %arg4[%c15, %c0_16] : memref<45x7xbf16, #tpu.memory_space<vmem>>, vector<5x7xbf16>
    %cst_17 = arith.constant dense<0.000000e+00> : vector<64x7xf32>
    %29 = tpu.matmul %27, %28, %cst_17 {dimension_numbers = #tpu.dot_dimension_numbers<[1], [0], [0], [1], [0, 0, 1, 1], [], []>} : vector<64x5xbf16>, vector<5x7xbf16>, vector<64x7xf32> -> vector<64x7xf32>
    %30 = arith.addf %24, %29 : vector<64x7xf32>
    %c20 = arith.constant 20 : index
    %c0_18 = arith.constant 0 : index
    %31 = vector.load %arg4[%c20, %c0_18] : memref<45x7xbf16, #tpu.memory_space<vmem>>, vector<5x7xbf16>
    %cst_19 = arith.constant dense<0.000000e+00> : vector<64x7xf32>
    %32 = tpu.matmul %3, %31, %cst_19 {dimension_numbers = #tpu.dot_dimension_numbers<[1], [0], [0], [1], [0, 0, 1, 1], [], []>} : vector<64x5xbf16>, vector<5x7xbf16>, vector<64x7xf32> -> vector<64x7xf32>
    %33 = arith.addf %30, %32 : vector<64x7xf32>
    %cst_20 = arith.constant 0.000000e+00 : bf16
    %34 = vector.broadcast %cst_20 : bf16 to vector<1x5xbf16>
    %35 = vector.extract_strided_slice %7 {offsets = [1, 0], sizes = [63, 5], strides = [1, 1]} : vector<64x5xbf16> to vector<63x5xbf16>
    %36 = tpu.concatenate %35, %34 in 0 : vector<63x5xbf16>, vector<1x5xbf16> -> vector<64x5xbf16>
    %c25 = arith.constant 25 : index
    %c0_21 = arith.constant 0 : index
    %37 = vector.load %arg4[%c25, %c0_21] : memref<45x7xbf16, #tpu.memory_space<vmem>>, vector<5x7xbf16>
    %cst_22 = arith.constant dense<0.000000e+00> : vector<64x7xf32>
    %38 = tpu.matmul %36, %37, %cst_22 {dimension_numbers = #tpu.dot_dimension_numbers<[1], [0], [0], [1], [0, 0, 1, 1], [], []>} : vector<64x5xbf16>, vector<5x7xbf16>, vector<64x7xf32> -> vector<64x7xf32>
    %39 = arith.addf %33, %38 : vector<64x7xf32>
    %cst_23 = arith.constant 0.000000e+00 : bf16
    %40 = vector.broadcast %cst_23 : bf16 to vector<7x5xbf16>
    %41 = vector.extract_strided_slice %5 {offsets = [7, 0], sizes = [57, 5], strides = [1, 1]} : vector<64x5xbf16> to vector<57x5xbf16>
    %42 = tpu.concatenate %41, %40 in 0 : vector<57x5xbf16>, vector<7x5xbf16> -> vector<64x5xbf16>
    %c30 = arith.constant 30 : index
    %c0_24 = arith.constant 0 : index
    %43 = vector.load %arg4[%c30, %c0_24] : memref<45x7xbf16, #tpu.memory_space<vmem>>, vector<5x7xbf16>
    %cst_25 = arith.constant dense<0.000000e+00> : vector<64x7xf32>
    %44 = tpu.matmul %42, %43, %cst_25 {dimension_numbers = #tpu.dot_dimension_numbers<[1], [0], [0], [1], [0, 0, 1, 1], [], []>} : vector<64x5xbf16>, vector<5x7xbf16>, vector<64x7xf32> -> vector<64x7xf32>
    %45 = arith.addf %39, %44 : vector<64x7xf32>
    %cst_26 = arith.constant 0.000000e+00 : bf16
    %46 = vector.broadcast %cst_26 : bf16 to vector<8x5xbf16>
    %47 = vector.extract_strided_slice %3 {offsets = [8, 0], sizes = [56, 5], strides = [1, 1]} : vector<64x5xbf16> to vector<56x5xbf16>
    %48 = tpu.concatenate %47, %46 in 0 : vector<56x5xbf16>, vector<8x5xbf16> -> vector<64x5xbf16>
    %c35 = arith.constant 35 : index
    %c0_27 = arith.constant 0 : index
    %49 = vector.load %arg4[%c35, %c0_27] : memref<45x7xbf16, #tpu.memory_space<vmem>>, vector<5x7xbf16>
    %cst_28 = arith.constant dense<0.000000e+00> : vector<64x7xf32>
    %50 = tpu.matmul %48, %49, %cst_28 {dimension_numbers = #tpu.dot_dimension_numbers<[1], [0], [0], [1], [0, 0, 1, 1], [], []>} : vector<64x5xbf16>, vector<5x7xbf16>, vector<64x7xf32> -> vector<64x7xf32>
    %51 = arith.addf %45, %50 : vector<64x7xf32>
    %cst_29 = arith.constant 0.000000e+00 : bf16
    %52 = vector.broadcast %cst_29 : bf16 to vector<9x5xbf16>
    %53 = vector.extract_strided_slice %7 {offsets = [9, 0], sizes = [55, 5], strides = [1, 1]} : vector<64x5xbf16> to vector<55x5xbf16>
    %54 = tpu.concatenate %53, %52 in 0 : vector<55x5xbf16>, vector<9x5xbf16> -> vector<64x5xbf16>
    %c40 = arith.constant 40 : index
    %c0_30 = arith.constant 0 : index
    %55 = vector.load %arg4[%c40, %c0_30] : memref<45x7xbf16, #tpu.memory_space<vmem>>, vector<5x7xbf16>
    %cst_31 = arith.constant dense<0.000000e+00> : vector<64x7xf32>
    %56 = tpu.matmul %54, %55, %cst_31 {dimension_numbers = #tpu.dot_dimension_numbers<[1], [0], [0], [1], [0, 0, 1, 1], [], []>} : vector<64x5xbf16>, vector<5x7xbf16>, vector<64x7xf32> -> vector<64x7xf32>
    %57 = arith.addf %51, %56 : vector<64x7xf32>
    %c0_32 = arith.constant 0 : index
    %c0_33 = arith.constant 0 : index
    %58 = vector.load %arg5[%c0_32, %c0_33] : memref<1x7xf32, #tpu.memory_space<vmem>>, vector<1x7xf32>
    %59 = vector.broadcast %58 : vector<1x7xf32> to vector<64x7xf32>
    %60 = arith.addf %57, %59 : vector<64x7xf32>
    %cst_34 = arith.constant 0.000000e+00 : f32
    %61 = vector.broadcast %cst_34 : f32 to vector<64x7xf32>
    %62 = arith.cmpf oge, %60, %61 : vector<64x7xf32>
    %cst_35 = arith.constant 1.000000e-01 : f32
    %63 = vector.broadcast %cst_35 : f32 to vector<64x7xf32>
    %64 = arith.mulf %60, %63 : vector<64x7xf32>
    %65 = arith.select %62, %60, %64 : vector<64x7xi1>, vector<64x7xf32>
    %66 = arith.truncf %65 : vector<64x7xf32> to vector<64x7xbf16>
    %c0_36 = arith.constant 0 : index
    %c0_37 = arith.constant 0 : index
    %c0_38 = arith.constant 0 : index
    %67 = vector.load %arg6[%c0_36, %c0_37, %c0_38] : memref<1x64x7xbf16, #tpu.memory_space<vmem>>, vector<1x64x7xbf16>
    %68 = vector.shape_cast %67 : vector<1x64x7xbf16> to vector<64x7xbf16>
    %69 = vector.shape_cast %66 : vector<64x7xbf16> to vector<1x64x7xbf16>
    tpu.vector_store %arg6[%c0_36, %c0_37, %c0_38], %69 {strides = array<i32>} : memref<1x64x7xbf16, #tpu.memory_space<vmem>>, vector<1x64x7xbf16>,
    return
  }
  func.func @transform_0(%arg0: i32) -> (i32, i32, i32) {
    %c0_i32 = arith.constant 0 : i32
    %c0_i32_0 = arith.constant 0 : i32
    %c0_i32_1 = arith.constant 0 : i32
    return %arg0, %c0_i32, %c0_i32_0 : i32, i32, i32
  }
  func.func @transform_1(%arg0: i32) -> (i32, i32) {
    %c0_i32 = arith.constant 0 : i32
    %c0_i32_0 = arith.constant 0 : i32
    %c0_i32_1 = arith.constant 0 : i32
    return %c0_i32, %c0_i32_0 : i32, i32
  }
  func.func @transform_2(%arg0: i32) -> (i32, i32) {
    %c0_i32 = arith.constant 0 : i32
    %c0_i32_0 = arith.constant 0 : i32
    %c0_i32_1 = arith.constant 0 : i32
    return %c0_i32, %c0_i32_0 : i32, i32
  }
  func.func @transform_3(%arg0: i32) -> (i32, i32) {
    %c0_i32 = arith.constant 0 : i32
    %c0_i32_0 = arith.constant 0 : i32
    %c0_i32_1 = arith.constant 0 : i32
    return %c0_i32, %c0_i32_0 : i32, i32
  }
  func.func @transform_4(%arg0: i32) -> (i32, i32) {
    %c0_i32 = arith.constant 0 : i32
    %c0_i32_0 = arith.constant 0 : i32
    %c0_i32_1 = arith.constant 0 : i32
    return %c0_i32, %c0_i32_0 : i32, i32
  }
  func.func @transform_5(%arg0: i32) -> (i32, i32, i32) {
    %c0_i32 = arith.constant 0 : i32
    %c0_i32_0 = arith.constant 0 : i32
    %c0_i32_1 = arith.constant 0 : i32
    return %arg0, %c0_i32, %c0_i32_0 : i32, i32, i32
  }
}

</mosaic_0001>

<llo_original>
// kernel: tpu_custom_call.1
$region0: #{tpu_custom_call.1}
  #allocation0 [shape = 'u32[]', space=smem, size = 0x4, offset = 0x4, fixed_abs, tag = 'smem constant byte address 0x4 - core index']
  #allocation1 [shape = 'u32[144,128]{1,0:T(1,128)}', space=vmem, size = 0x12000, scoped, tag = 'internal scratch']
  %s0 = inlined_call_operand.vmem [shape: bf16[1,64,5], index: 0, kind: input, shape index: {}]
  %s1 = inlined_call_operand.vmem [shape: bf16[64,1], index: 1, kind: input, shape index: {}]
  %s2 = inlined_call_operand.vmem [shape: bf16[64,1], index: 2, kind: input, shape index: {}]
  %s3 = inlined_call_operand.vmem [shape: bf16[45,7], index: 3, kind: input, shape index: {}]
  %s4 = inlined_call_operand.vmem [shape: f32[1,7], index: 4, kind: input, shape index: {}]
  %s5 = inlined_call_operand.vmem [shape: bf16[1,64,7], index: 5, kind: output, shape index: {}]
  %s6 = sld [smem:[#allocation0]]
  $region30: #{tpu_custom_call.1} parent=0
    _
  %s8 = ssub.s32 1, %s6
  %s9 = scalar_select 0, %s8, %s6
  // Predicated region
  $region2: #{tpu_custom_call.1} parent=0 // pred_check
    _
  $region3: #{tpu_custom_call.1} parent=0 // pred_check_branch
    %11 = sbr.rel (0) target = $region5
  $region4: #{tpu_custom_call.1} parent=0 // pred_region
    _
  $region5: #{tpu_custom_call.1} parent=0 // pred_fallthru
    _
  // Predicated region
  $region6: #{tpu_custom_call.1} parent=0 // pred_check
    _
  $region7: #{tpu_custom_call.1} parent=0 // pred_check_branch
    %13 = sbr.rel (0) target = $region9
  $region8: #{tpu_custom_call.1} parent=0 // pred_region
    _
  $region9: #{tpu_custom_call.1} parent=0 // pred_fallthru
    _
  // Predicated region
  $region10: #{tpu_custom_call.1} parent=0 // pred_check
    _
  $region11: #{tpu_custom_call.1} parent=0 // pred_check_branch
    %15 = sbr.rel (0) target = $region13
  $region12: #{tpu_custom_call.1} parent=0 // pred_region
    _
  $region13: #{tpu_custom_call.1} parent=0 // pred_fallthru
    _
  // Predicated region
  $region14: #{tpu_custom_call.1} parent=0 // pred_check
    _
  $region15: #{tpu_custom_call.1} parent=0 // pred_check_branch
    %17 = sbr.rel (0) target = $region17
  $region16: #{tpu_custom_call.1} parent=0 // pred_region
    _
  $region17: #{tpu_custom_call.1} parent=0 // pred_fallthru
    _
  // Predicated region
  $region18: #{tpu_custom_call.1} parent=0 // pred_check
    _
  $region19: #{tpu_custom_call.1} parent=0 // pred_check_branch
    %19 = sbr.rel (0) target = $region21
  $region20: #{tpu_custom_call.1} parent=0 // pred_region
    _
  $region21: #{tpu_custom_call.1} parent=0 // pred_fallthru
    _
  %v21 = vld [vmem:[%s1] sm:$0xf]
  %v22 = vld [vmem:[%s1 + $0x4] sm:$0xf]
  %v23 = vld [vmem:[%s1 + $0x8] sm:$0xf]
  %v24 = vld [vmem:[%s1 + $0xc] sm:$0xf]
  %v25 = vld [vmem:[%s1 + $0x10] sm:$0xf]
  %v26 = vld [vmem:[%s1 + $0x14] sm:$0xf]
  %v27 = vld [vmem:[%s1 + $0x18] sm:$0xf]
  %v28 = vld [vmem:[%s1 + $0x1c] sm:$0xf]
  %v29 = vld [vmem:[%s2] sm:$0xf]
  %v30 = vld [vmem:[%s2 + $0x4] sm:$0xf]
  %v31 = vld [vmem:[%s2 + $0x8] sm:$0xf]
  %v32 = vld [vmem:[%s2 + $0xc] sm:$0xf]
  %v33 = vld [vmem:[%s2 + $0x10] sm:$0xf]
  %v34 = vld [vmem:[%s2 + $0x14] sm:$0xf]
  %v35 = vld [vmem:[%s2 + $0x18] sm:$0xf]
  %v36 = vld [vmem:[%s2 + $0x1c] sm:$0xf]
  %v37 = vld [vmem:[%s0] sm:$0xf]
  %v38 = vld [vmem:[%s0 + $0x4] sm:$0xf]
  %v39 = vld [vmem:[%s0 + $0x8] sm:$0xf]
  %v40 = vld [vmem:[%s0 + $0xc] sm:$0xf]
  %v41 = vld [vmem:[%s0 + $0x10] sm:$0xf]
  %v42 = vld [vmem:[%s0 + $0x14] sm:$0xf]
  %v43 = vld [vmem:[%s0 + $0x18] sm:$0xf]
  %v44 = vld [vmem:[%s0 + $0x1c] sm:$0xf]
  %46 = vset.pattern.permute.xlu0 0
  %47 = vperm.xlu0 %46, %v21
  %v48 = vpop.permute.xlu0 %47
  %v51 = vunpack.c.l.s4 839922192
  %v52 = vunpack.c.0.s8 %v51
  %v53 = vlaneseq
  %v54 = vshrl.u32 %v53, 7
  %v55 = vsub.s32 %v52, %v54
  %v56 = vrot.slane %v48, %v55
  %58 = vset.pattern.permute.xlu0 0
  %59 = vperm.xlu0 %58, %v22
  %v60 = vpop.permute.xlu0 %59
  %v63 = vunpack.c.l.s4 839922192
  %v64 = vunpack.c.0.s8 %v63
  %v65 = vlaneseq
  %v66 = vshrl.u32 %v65, 7
  %v67 = vsub.s32 %v64, %v66
  %v68 = vrot.slane %v60, %v67
  %70 = vset.pattern.permute.xlu0 0
  %71 = vperm.xlu0 %70, %v23
  %v72 = vpop.permute.xlu0 %71
  %v75 = vunpack.c.l.s4 839922192
  %v76 = vunpack.c.0.s8 %v75
  %v77 = vlaneseq
  %v78 = vshrl.u32 %v77, 7
  %v79 = vsub.s32 %v76, %v78
  %v80 = vrot.slane %v72, %v79
  %82 = vset.pattern.permute.xlu0 0
  %83 = vperm.xlu0 %82, %v24
  %v84 = vpop.permute.xlu0 %83
  %v87 = vunpack.c.l.s4 839922192
  %v88 = vunpack.c.0.s8 %v87
  %v89 = vlaneseq
  %v90 = vshrl.u32 %v89, 7
  %v91 = vsub.s32 %v88, %v90
  %v92 = vrot.slane %v84, %v91
  %94 = vset.pattern.permute.xlu0 0
  %95 = vperm.xlu0 %94, %v25
  %v96 = vpop.permute.xlu0 %95
  %v99 = vunpack.c.l.s4 839922192
  %v100 = vunpack.c.0.s8 %v99
  %v101 = vlaneseq
  %v102 = vshrl.u32 %v101, 7
  %v103 = vsub.s32 %v100, %v102
  %v104 = vrot.slane %v96, %v103
  %106 = vset.pattern.permute.xlu0 0
  %107 = vperm.xlu0 %106, %v26
  %v108 = vpop.permute.xlu0 %107
  %v111 = vunpack.c.l.s4 839922192
  %v112 = vunpack.c.0.s8 %v111
  %v113 = vlaneseq
  %v114 = vshrl.u32 %v113, 7
  %v115 = vsub.s32 %v112, %v114
  %v116 = vrot.slane %v108, %v115
  %118 = vset.pattern.permute.xlu0 0
  %119 = vperm.xlu0 %118, %v27
  %v120 = vpop.permute.xlu0 %119
  %v123 = vunpack.c.l.s4 839922192
  %v124 = vunpack.c.0.s8 %v123
  %v125 = vlaneseq
  %v126 = vshrl.u32 %v125, 7
  %v127 = vsub.s32 %v124, %v126
  %v128 = vrot.slane %v120, %v127
  %130 = vset.pattern.permute.xlu0 0
  %131 = vperm.xlu0 %130, %v28
  %v132 = vpop.permute.xlu0 %131
  %v135 = vunpack.c.l.s4 839922192
  %v136 = vunpack.c.0.s8 %v135
  %v137 = vlaneseq
  %v138 = vshrl.u32 %v137, 7
  %v139 = vsub.s32 %v136, %v138
  %v140 = vrot.slane %v132, %v139
  %v141 = vmul.bf16 %v37, %v56
  %v142 = vmul.bf16 %v38, %v68
  %v143 = vmul.bf16 %v39, %v80
  %v144 = vmul.bf16 %v40, %v92
  %v145 = vmul.bf16 %v41, %v104
  %v146 = vmul.bf16 %v42, %v116
  %v147 = vmul.bf16 %v43, %v128
  %v148 = vmul.bf16 %v44, %v140
  %150 = vset.pattern.permute.xlu0 0
  %151 = vperm.xlu0 %150, %v29
  %v152 = vpop.permute.xlu0 %151
  %v155 = vunpack.c.l.s4 839922192
  %v156 = vunpack.c.0.s8 %v155
  %v157 = vlaneseq
  %v158 = vshrl.u32 %v157, 7
  %v159 = vsub.s32 %v156, %v158
  %v160 = vrot.slane %v152, %v159
  %162 = vset.pattern.permute.xlu0 0
  %163 = vperm.xlu0 %162, %v30
  %v164 = vpop.permute.xlu0 %163
  %v167 = vunpack.c.l.s4 839922192
  %v168 = vunpack.c.0.s8 %v167
  %v169 = vlaneseq
  %v170 = vshrl.u32 %v169, 7
  %v171 = vsub.s32 %v168, %v170
  %v172 = vrot.slane %v164, %v171
  %174 = vset.pattern.permute.xlu0 0
  %175 = vperm.xlu0 %174, %v31
  %v176 = vpop.permute.xlu0 %175
  %v179 = vunpack.c.l.s4 839922192
  %v180 = vunpack.c.0.s8 %v179
  %v181 = vlaneseq
  %v182 = vshrl.u32 %v181, 7
  %v183 = vsub.s32 %v180, %v182
  %v184 = vrot.slane %v176, %v183
  %186 = vset.pattern.permute.xlu0 0
  %187 = vperm.xlu0 %186, %v32
  %v188 = vpop.permute.xlu0 %187
  %v191 = vunpack.c.l.s4 839922192
  %v192 = vunpack.c.0.s8 %v191
  %v193 = vlaneseq
  %v194 = vshrl.u32 %v193, 7
  %v195 = vsub.s32 %v192, %v194
  %v196 = vrot.slane %v188, %v195
  %198 = vset.pattern.permute.xlu0 0
  %199 = vperm.xlu0 %198, %v33
  %v200 = vpop.permute.xlu0 %199
  %v203 = vunpack.c.l.s4 839922192
  %v204 = vunpack.c.0.s8 %v203
  %v205 = vlaneseq
  %v206 = vshrl.u32 %v205, 7
  %v207 = vsub.s32 %v204, %v206
  %v208 = vrot.slane %v200, %v207
  %210 = vset.pattern.permute.xlu0 0
  %211 = vperm.xlu0 %210, %v34
  %v212 = vpop.permute.xlu0 %211
  %v215 = vunpack.c.l.s4 839922192
  %v216 = vunpack.c.0.s8 %v215
  %v217 = vlaneseq
  %v218 = vshrl.u32 %v217, 7
  %v219 = vsub.s32 %v216, %v218
  %v220 = vrot.slane %v212, %v219
  %222 = vset.pattern.permute.xlu0 0
  %223 = vperm.xlu0 %222, %v35
  %v224 = vpop.permute.xlu0 %223
  %v227 = vunpack.c.l.s4 839922192
  %v228 = vunpack.c.0.s8 %v227
  %v229 = vlaneseq
  %v230 = vshrl.u32 %v229, 7
  %v231 = vsub.s32 %v228, %v230
  %v232 = vrot.slane %v224, %v231
  %234 = vset.pattern.permute.xlu0 0
  %235 = vperm.xlu0 %234, %v36
  %v236 = vpop.permute.xlu0 %235
  %v239 = vunpack.c.l.s4 839922192
  %v240 = vunpack.c.0.s8 %v239
  %v241 = vlaneseq
  %v242 = vshrl.u32 %v241, 7
  %v243 = vsub.s32 %v240, %v242
  %v244 = vrot.slane %v236, %v243
  %v245 = vmul.bf16 %v37, %v160
  %v246 = vmul.bf16 %v38, %v172
  %v247 = vmul.bf16 %v39, %v184
  %v248 = vmul.bf16 %v40, %v196
  %v249 = vmul.bf16 %v41, %v208
  %v250 = vmul.bf16 %v42, %v220
  %v251 = vmul.bf16 %v43, %v232
  %v252 = vmul.bf16 %v44, %v244
  %v260 = vunpack.c.l.b16 %v141
  %v261 = vunpack.c.l.b16 %v142
  %v262 = vunpack.c.l.b16 %v143
  %v263 = vunpack.c.l.b16 %v144
  %v264 = vunpack.c.l.b16 %v145
  %v265 = vunpack.c.l.b16 %v146
  %v266 = vunpack.c.l.b16 %v147
  %v267 = vpack.c.b16 %v261, %v260
  %v268 = vpack.c.b16 %v263, %v262
  %v269 = vpack.c.b16 %v265, %v264
  %v270 = vpack.c.b16 %v266, %v266
  %vm271 = vsmask.f32 4352
  %v273 = vshrl.u32 %v267, 16
  %v275 = vrot.slane %v273, 3
  %v276 = vshll.u32 %v267, 16
  %v278 = vrot.slane %v276, 4
  %v279 = vor.u32 %v275, %v278
  %v281 = vshrl.u32 %v268, 16
  %v283 = vrot.slane %v281, 3
  %v284 = vshll.u32 %v268, 16
  %v286 = vrot.slane %v284, 4
  %v287 = vor.u32 %v283, %v286
  %v288 = vsel %vm271, %v279, %v287
  %v290 = vshrl.u32 %v269, 16
  %v292 = vrot.slane %v290, 3
  %v293 = vshll.u32 %v269, 16
  %v295 = vrot.slane %v293, 4
  %v296 = vor.u32 %v292, %v295
  %v297 = vsel %vm271, %v287, %v296
  %v299 = vshrl.u32 %v270, 16
  %v301 = vrot.slane %v299, 3
  %v302 = vshll.u32 %v270, 16
  %v304 = vrot.slane %v302, 4
  %v305 = vor.u32 %v301, %v304
  %v306 = vsel %vm271, %v296, %v305
  %vm308 = vcmask 1044480
  %vm309 = vmand %vm308, %vm271
  %v310 = vsel %vm309, 0, %v279
  %v311 = vld [vmem:[%s3] sm:$0x7]
  %v319 = vunpack.c.l.b16 %v37
  %v320 = vunpack.c.l.b16 %v38
  %v321 = vunpack.c.l.b16 %v39
  %v322 = vunpack.c.l.b16 %v40
  %v323 = vunpack.c.l.b16 %v41
  %v324 = vunpack.c.l.b16 %v42
  %v325 = vunpack.c.l.b16 %v43
  %v326 = vpack.c.b16 %v319, %v319
  %v327 = vpack.c.b16 %v321, %v320
  %v328 = vpack.c.b16 %v323, %v322
  %v329 = vpack.c.b16 %v325, %v324
  %vm330 = vcmask 1043456
  %v333 = vsel %vm330, 0, %v326
  %v334 = vld [vmem:[%s3] sm:$0xc]
  %v335 = vld [vmem:[%s3 + $0x4] sm:$0x1]
  %v338 = vunpack.c.l.b16 %v334
  %v339 = vunpack.c.l.b16 %v335
  %v340 = vpack.c.b16 %v339, %v338
  %v342 = vshrl.u32 %v340, 16
  %v344 = vrot.slane %v342, 2
  %v345 = vshll.u32 %v340, 16
  %v347 = vrot.slane %v345, 3
  %v348 = vor.u32 %v344, %v347
  %vm349 = vcmask 39936
  %v350 = vsel %vm349, %v333, 0
  %v353 = vsel %vm349, %v327, 0
  %v356 = vsel %vm349, %v328, 0
  %v359 = vsel %vm349, %v329, 0
  %vm361 = vcmask 1041408
  %vm362 = vcmask 1042432
  %v363 = vsel %vm361, 4294967295, 65535
  %v364 = vsel %vm362, %v363, 0
  %v366 = vand.u32 %v348, %v364
  %368 = vmatprep.subr.bf16.mxu0 0
  %369 = vmatpush1.bf16.msra.mxu0 %v366
  %370 = vmatprep.subr.bf16.mxu0 0
  %371 = vmatpush1.bf16.msra.mxu0 0
  %372 = vmatprep.subr.bf16.mxu0 0
  %373 = vmatpush1.bf16.msra.mxu0 0
  %374 = vmatprep.subr.bf16.mxu0 0
  %375 = vmatpush1.bf16.msra.mxu0 0
  %376 = vmatprep.subr.bf16.mxu0 0
  %377 = vmatpush1.bf16.msra.mxu0 0
  %378 = vmatprep.subr.bf16.mxu0 0
  %379 = vmatpush1.bf16.msra.mxu0 0
  %380 = vmatprep.subr.bf16.mxu0 0
  %381 = vmatpush1.bf16.msra.mxu0 0
  %382 = vmatprep.subr.bf16.mxu0 0
  %383 = vmatpush1.bf16.msra.mxu0 0
  %384 = vmatprep.subr.bf16.mxu0 0
  %385 = vmatpush1.bf16.msra.mxu0 0
  %386 = vmatprep.subr.bf16.mxu0 0
  %387 = vmatpush1.bf16.msra.mxu0 0
  %388 = vmatprep.subr.bf16.mxu0 0
  %389 = vmatpush1.bf16.msra.mxu0 0
  %390 = vmatprep.subr.bf16.mxu0 0
  %391 = vmatpush1.bf16.msra.mxu0 0
  %392 = vmatprep.subr.bf16.mxu0 0
  %393 = vmatpush1.bf16.msra.mxu0 0
  %394 = vmatprep.subr.bf16.mxu0 0
  %395 = vmatpush1.bf16.msra.mxu0 0
  %396 = vmatprep.subr.bf16.mxu0 0
  %397 = vmatpush1.bf16.msra.mxu0 0
  %398 = vmatprep.subr.bf16.mxu0 0
  %399 = vmatpush1.bf16.msra.mxu0 0
  %400 = vmatprep.mubr.bf16.mxu0 0
  %401 = vmatmul.mubr.bf16.gmra.mrb[0].mxu0 %v350
  %v402 = vpop.f32.mrb[0].mxu0
  %v403 = vadd.f32 0.0, %v402
  %v404 = vpop.f32.mrb[0].mxu0
  %v405 = vpop.f32.mrb[0].mxu0
  %v406 = vadd.f32 0.0, %v405
  %v407 = vpop.f32.mrb[0].mxu0
  %408 = vmatprep.mubr.bf16.mxu0 0
  %409 = vmatmul.mubr.bf16.gmra.mrb[0].mxu0 %v353
  %v410 = vpop.f32.mrb[0].mxu0
  %v411 = vadd.f32 0.0, %v410
  %v412 = vpop.f32.mrb[0].mxu0
  %v413 = vpop.f32.mrb[0].mxu0
  %v414 = vadd.f32 0.0, %v413
  %v415 = vpop.f32.mrb[0].mxu0
  %416 = vmatprep.mubr.bf16.mxu0 0
  %417 = vmatmul.mubr.bf16.gmra.mrb[0].mxu0 %v356
  %v418 = vpop.f32.mrb[0].mxu0
  %v419 = vadd.f32 0.0, %v418
  %v420 = vpop.f32.mrb[0].mxu0
  %v421 = vpop.f32.mrb[0].mxu0
  %v422 = vadd.f32 0.0, %v421
  %v423 = vpop.f32.mrb[0].mxu0
  %424 = vmatprep.mubr.bf16.mxu0 0
  %425 = vmatmul.mubr.bf16.gmra.mrb[0].mxu0 %v359
  %v426 = vpop.f32.mrb[0].mxu0
  %v427 = vadd.f32 0.0, %v426
  %v428 = vpop.f32.mrb[0].mxu0
  %v429 = vpop.f32.mrb[0].mxu0
  %v430 = vadd.f32 0.0, %v429
  %v431 = vpop.f32.mrb[0].mxu0
  %432 = vdwg.mxu0
  %v434 = vsel %vm349, %v310, 0
  %v437 = vsel %vm349, %v288, 0
  %v440 = vsel %vm349, %v297, 0
  %v443 = vsel %vm349, %v306, 0
  %v446 = vand.u32 %v311, %v364
  %448 = vmatprep.subr.bf16.mxu0 0
  %449 = vmatpush1.bf16.msra.mxu0 %v446
  %450 = vmatprep.subr.bf16.mxu0 0
  %451 = vmatpush1.bf16.msra.mxu0 0
  %452 = vmatprep.subr.bf16.mxu0 0
  %453 = vmatpush1.bf16.msra.mxu0 0
  %454 = vmatprep.subr.bf16.mxu0 0
  %455 = vmatpush1.bf16.msra.mxu0 0
  %456 = vmatprep.subr.bf16.mxu0 0
  %457 = vmatpush1.bf16.msra.mxu0 0
  %458 = vmatprep.subr.bf16.mxu0 0
  %459 = vmatpush1.bf16.msra.mxu0 0
  %460 = vmatprep.subr.bf16.mxu0 0
  %461 = vmatpush1.bf16.msra.mxu0 0
  %462 = vmatprep.subr.bf16.mxu0 0
  %463 = vmatpush1.bf16.msra.mxu0 0
  %464 = vmatprep.subr.bf16.mxu0 0
  %465 = vmatpush1.bf16.msra.mxu0 0
  %466 = vmatprep.subr.bf16.mxu0 0
  %467 = vmatpush1.bf16.msra.mxu0 0
  %468 = vmatprep.subr.bf16.mxu0 0
  %469 = vmatpush1.bf16.msra.mxu0 0
  %470 = vmatprep.subr.bf16.mxu0 0
  %471 = vmatpush1.bf16.msra.mxu0 0
  %472 = vmatprep.subr.bf16.mxu0 0
  %473 = vmatpush1.bf16.msra.mxu0 0
  %474 = vmatprep.subr.bf16.mxu0 0
  %475 = vmatpush1.bf16.msra.mxu0 0
  %476 = vmatprep.subr.bf16.mxu0 0
  %477 = vmatpush1.bf16.msra.mxu0 0
  %478 = vmatprep.subr.bf16.mxu0 0
  %479 = vmatpush1.bf16.msra.mxu0 0
  %480 = vmatprep.mubr.bf16.mxu0 0
  %481 = vmatmul.mubr.bf16.gmra.mrb[0].mxu0 %v434
  %v482 = vpop.f32.mrb[0].mxu0
  %v483 = vadd.f32 %v403, %v482
  %v484 = vpop.f32.mrb[0].mxu0
  %v485 = vpop.f32.mrb[0].mxu0
  %v486 = vadd.f32 %v406, %v485
  %v487 = vpop.f32.mrb[0].mxu0
  %488 = vmatprep.mubr.bf16.mxu0 0
  %489 = vmatmul.mubr.bf16.gmra.mrb[0].mxu0 %v437
  %v490 = vpop.f32.mrb[0].mxu0
  %v491 = vadd.f32 %v411, %v490
  %v492 = vpop.f32.mrb[0].mxu0
  %v493 = vpop.f32.mrb[0].mxu0
  %v494 = vadd.f32 %v414, %v493
  %v495 = vpop.f32.mrb[0].mxu0
  %496 = vmatprep.mubr.bf16.mxu0 0
  %497 = vmatmul.mubr.bf16.gmra.mrb[0].mxu0 %v440
  %v498 = vpop.f32.mrb[0].mxu0
  %v499 = vadd.f32 %v419, %v498
  %v500 = vpop.f32.mrb[0].mxu0
  %v501 = vpop.f32.mrb[0].mxu0
  %v502 = vadd.f32 %v422, %v501
  %v503 = vpop.f32.mrb[0].mxu0
  %504 = vmatprep.mubr.bf16.mxu0 0
  %505 = vmatmul.mubr.bf16.gmra.mrb[0].mxu0 %v443
  %v506 = vpop.f32.mrb[0].mxu0
  %v507 = vadd.f32 %v427, %v506
  %v508 = vpop.f32.mrb[0].mxu0
  %v509 = vpop.f32.mrb[0].mxu0
  %v510 = vadd.f32 %v430, %v509
  %v511 = vpop.f32.mrb[0].mxu0
  %512 = vdwg.mxu0
  %v521 = vunpack.c.l.b16 %v245
  %v522 = vunpack.c.l.b16 %v246
  %v523 = vunpack.c.l.b16 %v247
  %v524 = vunpack.c.l.b16 %v248
  %v525 = vunpack.c.l.b16 %v249
  %v526 = vunpack.c.l.b16 %v250
  %v527 = vunpack.c.l.b16 %v251
  %v528 = vunpack.c.l.b16 %v252
  %v529 = vpack.c.b16 %v522, %v521
  %v530 = vpack.c.b16 %v524, %v523
  %v531 = vpack.c.b16 %v526, %v525
  %v532 = vpack.c.b16 %v528, %v527
  %vm533 = vsmask.f32 3328
  %v535 = vshrl.u32 %v529, 16
  %v537 = vrot.slane %v535, 4
  %v538 = vshll.u32 %v529, 16
  %v540 = vrot.slane %v538, 5
  %v541 = vor.u32 %v537, %v540
  %v543 = vshrl.u32 %v530, 16
  %v545 = vrot.slane %v543, 4
  %v546 = vshll.u32 %v530, 16
  %v548 = vrot.slane %v546, 5
  %v549 = vor.u32 %v545, %v548
  %v550 = vsel %vm533, %v541, %v549
  %v552 = vshrl.u32 %v531, 16
  %v554 = vrot.slane %v552, 4
  %v555 = vshll.u32 %v531, 16
  %v557 = vrot.slane %v555, 5
  %v558 = vor.u32 %v554, %v557
  %v559 = vsel %vm533, %v549, %v558
  %v561 = vshrl.u32 %v532, 16
  %v563 = vrot.slane %v561, 4
  %v564 = vshll.u32 %v532, 16
  %v566 = vrot.slane %v564, 5
  %v567 = vor.u32 %v563, %v566
  %v568 = vsel %vm533, %v558, %v567
  %vm570 = vcmask 1043456
  %vm571 = vmand %vm570, %vm533
  %v572 = vsel %vm571, 0, %v541
  %v573 = vld [vmem:[%s3 + $0x4] sm:$0xe]
  %v575 = vunpack.c.l.b16 %v573
  %v576 = vpack.c.b16 %v575, %v575
  %v577 = vrot.slane %v576, 1
  %v579 = vsel %vm349, %v572, 0
  %v582 = vsel %vm349, %v550, 0
  %v585 = vsel %vm349, %v559, 0
  %v588 = vsel %vm349, %v568, 0
  %v591 = vand.u32 %v577, %v364
  %593 = vmatprep.subr.bf16.mxu0 0
  %594 = vmatpush1.bf16.msra.mxu0 %v591
  %595 = vmatprep.subr.bf16.mxu0 0
  %596 = vmatpush1.bf16.msra.mxu0 0
  %597 = vmatprep.subr.bf16.mxu0 0
  %598 = vmatpush1.bf16.msra.mxu0 0
  %599 = vmatprep.subr.bf16.mxu0 0
  %600 = vmatpush1.bf16.msra.mxu0 0
  %601 = vmatprep.subr.bf16.mxu0 0
  %602 = vmatpush1.bf16.msra.mxu0 0
  %603 = vmatprep.subr.bf16.mxu0 0
  %604 = vmatpush1.bf16.msra.mxu0 0
  %605 = vmatprep.subr.bf16.mxu0 0
  %606 = vmatpush1.bf16.msra.mxu0 0
  %607 = vmatprep.subr.bf16.mxu0 0
  %608 = vmatpush1.bf16.msra.mxu0 0
  %609 = vmatprep.subr.bf16.mxu0 0
  %610 = vmatpush1.bf16.msra.mxu0 0
  %611 = vmatprep.subr.bf16.mxu0 0
  %612 = vmatpush1.bf16.msra.mxu0 0
  %613 = vmatprep.subr.bf16.mxu0 0
  %614 = vmatpush1.bf16.msra.mxu0 0
  %615 = vmatprep.subr.bf16.mxu0 0
  %616 = vmatpush1.bf16.msra.mxu0 0
  %617 = vmatprep.subr.bf16.mxu0 0
  %618 = vmatpush1.bf16.msra.mxu0 0
  %619 = vmatprep.subr.bf16.mxu0 0
  %620 = vmatpush1.bf16.msra.mxu0 0
  %621 = vmatprep.subr.bf16.mxu0 0
  %622 = vmatpush1.bf16.msra.mxu0 0
  %623 = vmatprep.subr.bf16.mxu0 0
  %624 = vmatpush1.bf16.msra.mxu0 0
  %625 = vmatprep.mubr.bf16.mxu0 0
  %626 = vmatmul.mubr.bf16.gmra.mrb[0].mxu0 %v579
  %v627 = vpop.f32.mrb[0].mxu0
  %v628 = vadd.f32 0.0, %v627
  %v629 = vpop.f32.mrb[0].mxu0
  %v630 = vpop.f32.mrb[0].mxu0
  %v631 = vadd.f32 0.0, %v630
  %v632 = vpop.f32.mrb[0].mxu0
  %633 = vmatprep.mubr.bf16.mxu0 0
  %634 = vmatmul.mubr.bf16.gmra.mrb[0].mxu0 %v582
  %v635 = vpop.f32.mrb[0].mxu0
  %v636 = vadd.f32 0.0, %v635
  %v637 = vpop.f32.mrb[0].mxu0
  %v638 = vpop.f32.mrb[0].mxu0
  %v639 = vadd.f32 0.0, %v638
  %v640 = vpop.f32.mrb[0].mxu0
  %641 = vmatprep.mubr.bf16.mxu0 0
  %642 = vmatmul.mubr.bf16.gmra.mrb[0].mxu0 %v585
  %v643 = vpop.f32.mrb[0].mxu0
  %v644 = vadd.f32 0.0, %v643
  %v645 = vpop.f32.mrb[0].mxu0
  %v646 = vpop.f32.mrb[0].mxu0
  %v647 = vadd.f32 0.0, %v646
  %v648 = vpop.f32.mrb[0].mxu0
  %649 = vmatprep.mubr.bf16.mxu0 0
  %650 = vmatmul.mubr.bf16.gmra.mrb[0].mxu0 %v588
  %v651 = vpop.f32.mrb[0].mxu0
  %v652 = vadd.f32 0.0, %v651
  %v653 = vpop.f32.mrb[0].mxu0
  %v654 = vpop.f32.mrb[0].mxu0
  %v655 = vadd.f32 0.0, %v654
  %v656 = vpop.f32.mrb[0].mxu0
  %657 = vdwg.mxu0
  %v658 = vadd.f32 %v483, %v628
  %v659 = vadd.f32 %v486, %v631
  %v660 = vadd.f32 %v491, %v636
  %v661 = vadd.f32 %v494, %v639
  %v662 = vadd.f32 %v499, %v644
  %v663 = vadd.f32 %v502, %v647
  %v664 = vadd.f32 %v507, %v652
  %v665 = vadd.f32 %v510, %v655
  %v667 = vunpack.c.l.b16 %v148
  %v668 = vpack.c.b16 %v667, %v266
  %vm669 = vsmask.f32 256
  %v670 = vrot.slane %v273, 7
  %v671 = vor.u32 %v670, %v276
  %v672 = vrot.slane %v281, 7
  %v673 = vor.u32 %v672, %v284
  %v674 = vsel %vm669, %v670, %v673
  %v675 = vrot.slane %v290, 7
  %v676 = vor.u32 %v675, %v293
  %v677 = vsel %vm669, %v672, %v676
  %v679 = vshrl.u32 %v668, 16
  %v681 = vrot.slane %v679, 7
  %v682 = vshll.u32 %v668, 16
  %v684 = vor.u32 %v681, %v682
  %v685 = vsel %vm669, %v675, %v684
  %vm687 = vcmask 1040384
  %vm688 = vmand %vm687, %vm669
  %v689 = vsel %vm688, 0, %v671
  %v690 = vld [vmem:[%s3 + $0x4] sm:$0x8]
  %v691 = vld [vmem:[%s3 + $0x8] sm:$0x3]
  %v694 = vunpack.c.l.b16 %v690
  %v695 = vunpack.c.l.b16 %v691
  %v696 = vpack.c.b16 %v695, %v694
  %v698 = vshrl.u32 %v696, 16
  %v700 = vrot.slane %v698, 3
  %v701 = vshll.u32 %v696, 16
  %v703 = vrot.slane %v701, 4
  %v704 = vor.u32 %v700, %v703
  %v706 = vsel %vm349, %v689, 0
  %v709 = vsel %vm349, %v674, 0
  %v712 = vsel %vm349, %v677, 0
  %v715 = vsel %vm349, %v685, 0
  %v718 = vand.u32 %v704, %v364
  %720 = vmatprep.subr.bf16.mxu0 0
  %721 = vmatpush1.bf16.msra.mxu0 %v718
  %722 = vmatprep.subr.bf16.mxu0 0
  %723 = vmatpush1.bf16.msra.mxu0 0
  %724 = vmatprep.subr.bf16.mxu0 0
  %725 = vmatpush1.bf16.msra.mxu0 0
  %726 = vmatprep.subr.bf16.mxu0 0
  %727 = vmatpush1.bf16.msra.mxu0 0
  %728 = vmatprep.subr.bf16.mxu0 0
  %729 = vmatpush1.bf16.msra.mxu0 0
  %730 = vmatprep.subr.bf16.mxu0 0
  %731 = vmatpush1.bf16.msra.mxu0 0
  %732 = vmatprep.subr.bf16.mxu0 0
  %733 = vmatpush1.bf16.msra.mxu0 0
  %734 = vmatprep.subr.bf16.mxu0 0
  %735 = vmatpush1.bf16.msra.mxu0 0
  %736 = vmatprep.subr.bf16.mxu0 0
  %737 = vmatpush1.bf16.msra.mxu0 0
  %738 = vmatprep.subr.bf16.mxu0 0
  %739 = vmatpush1.bf16.msra.mxu0 0
  %740 = vmatprep.subr.bf16.mxu0 0
  %741 = vmatpush1.bf16.msra.mxu0 0
  %742 = vmatprep.subr.bf16.mxu0 0
  %743 = vmatpush1.bf16.msra.mxu0 0
  %744 = vmatprep.subr.bf16.mxu0 0
  %745 = vmatpush1.bf16.msra.mxu0 0
  %746 = vmatprep.subr.bf16.mxu0 0
  %747 = vmatpush1.bf16.msra.mxu0 0
  %748 = vmatprep.subr.bf16.mxu0 0
  %749 = vmatpush1.bf16.msra.mxu0 0
  %750 = vmatprep.subr.bf16.mxu0 0
  %751 = vmatpush1.bf16.msra.mxu0 0
  %752 = vmatprep.mubr.bf16.mxu0 0
  %753 = vmatmul.mubr.bf16.gmra.mrb[0].mxu0 %v706
  %v754 = vpop.f32.mrb[0].mxu0
  %v755 = vadd.f32 0.0, %v754
  %v756 = vpop.f32.mrb[0].mxu0
  %v757 = vpop.f32.mrb[0].mxu0
  %v758 = vadd.f32 0.0, %v757
  %v759 = vpop.f32.mrb[0].mxu0
  %760 = vmatprep.mubr.bf16.mxu0 0
  %761 = vmatmul.mubr.bf16.gmra.mrb[0].mxu0 %v709
  %v762 = vpop.f32.mrb[0].mxu0
  %v763 = vadd.f32 0.0, %v762
  %v764 = vpop.f32.mrb[0].mxu0
  %v765 = vpop.f32.mrb[0].mxu0
  %v766 = vadd.f32 0.0, %v765
  %v767 = vpop.f32.mrb[0].mxu0
  %768 = vmatprep.mubr.bf16.mxu0 0
  %769 = vmatmul.mubr.bf16.gmra.mrb[0].mxu0 %v712
  %v770 = vpop.f32.mrb[0].mxu0
  %v771 = vadd.f32 0.0, %v770
  %v772 = vpop.f32.mrb[0].mxu0
  %v773 = vpop.f32.mrb[0].mxu0
  %v774 = vadd.f32 0.0, %v773
  %v775 = vpop.f32.mrb[0].mxu0
  %776 = vmatprep.mubr.bf16.mxu0 0
  %777 = vmatmul.mubr.bf16.gmra.mrb[0].mxu0 %v715
  %v778 = vpop.f32.mrb[0].mxu0
  %v779 = vadd.f32 0.0, %v778
  %v780 = vpop.f32.mrb[0].mxu0
  %v781 = vpop.f32.mrb[0].mxu0
  %v782 = vadd.f32 0.0, %v781
  %v783 = vpop.f32.mrb[0].mxu0
  %784 = vdwg.mxu0
  %v785 = vadd.f32 %v658, %v755
  %v786 = vadd.f32 %v659, %v758
  %v787 = vadd.f32 %v660, %v763
  %v788 = vadd.f32 %v661, %v766
  %v789 = vadd.f32 %v662, %v771
  %v790 = vadd.f32 %v663, %v774
  %v791 = vadd.f32 %v664, %v779
  %v792 = vadd.f32 %v665, %v782
  %v793 = vld [vmem:[%s3 + $0x8] sm:$0xc]
  %v794 = vld [vmem:[%s3 + $0xc] sm:$0x1]
  %v796 = vunpack.c.l.b16 %v44
  %v797 = vpack.c.b16 %v320, %v319
  %v798 = vpack.c.b16 %v322, %v321
  %v799 = vpack.c.b16 %v324, %v323
  %v800 = vpack.c.b16 %v796, %v325
  %v803 = vunpack.c.l.b16 %v793
  %v804 = vunpack.c.l.b16 %v794
  %v805 = vpack.c.b16 %v804, %v803
  %v806 = vrot.slane %v805, 2
  %v808 = vsel %vm349, %v797, 0
  %v811 = vsel %vm349, %v798, 0
  %v814 = vsel %vm349, %v799, 0
  %v817 = vsel %vm349, %v800, 0
  %v820 = vand.u32 %v806, %v364
  %822 = vmatprep.subr.bf16.mxu0 0
  %823 = vmatpush1.bf16.msra.mxu0 %v820
  %824 = vmatprep.subr.bf16.mxu0 0
  %825 = vmatpush1.bf16.msra.mxu0 0
  %826 = vmatprep.subr.bf16.mxu0 0
  %827 = vmatpush1.bf16.msra.mxu0 0
  %828 = vmatprep.subr.bf16.mxu0 0
  %829 = vmatpush1.bf16.msra.mxu0 0
  %830 = vmatprep.subr.bf16.mxu0 0
  %831 = vmatpush1.bf16.msra.mxu0 0
  %832 = vmatprep.subr.bf16.mxu0 0
  %833 = vmatpush1.bf16.msra.mxu0 0
  %834 = vmatprep.subr.bf16.mxu0 0
  %835 = vmatpush1.bf16.msra.mxu0 0
  %836 = vmatprep.subr.bf16.mxu0 0
  %837 = vmatpush1.bf16.msra.mxu0 0
  %838 = vmatprep.subr.bf16.mxu0 0
  %839 = vmatpush1.bf16.msra.mxu0 0
  %840 = vmatprep.subr.bf16.mxu0 0
  %841 = vmatpush1.bf16.msra.mxu0 0
  %842 = vmatprep.subr.bf16.mxu0 0
  %843 = vmatpush1.bf16.msra.mxu0 0
  %844 = vmatprep.subr.bf16.mxu0 0
  %845 = vmatpush1.bf16.msra.mxu0 0
  %846 = vmatprep.subr.bf16.mxu0 0
  %847 = vmatpush1.bf16.msra.mxu0 0
  %848 = vmatprep.subr.bf16.mxu0 0
  %849 = vmatpush1.bf16.msra.mxu0 0
  %850 = vmatprep.subr.bf16.mxu0 0
  %851 = vmatpush1.bf16.msra.mxu0 0
  %852 = vmatprep.subr.bf16.mxu0 0
  %853 = vmatpush1.bf16.msra.mxu0 0
  %854 = vmatprep.mubr.bf16.mxu0 0
  %855 = vmatmul.mubr.bf16.gmra.mrb[0].mxu0 %v808
  %v856 = vpop.f32.mrb[0].mxu0
  %v857 = vadd.f32 0.0, %v856
  %v858 = vpop.f32.mrb[0].mxu0
  %v859 = vpop.f32.mrb[0].mxu0
  %v860 = vadd.f32 0.0, %v859
  %v861 = vpop.f32.mrb[0].mxu0
  %862 = vmatprep.mubr.bf16.mxu0 0
  %863 = vmatmul.mubr.bf16.gmra.mrb[0].mxu0 %v811
  %v864 = vpop.f32.mrb[0].mxu0
  %v865 = vadd.f32 0.0, %v864
  %v866 = vpop.f32.mrb[0].mxu0
  %v867 = vpop.f32.mrb[0].mxu0
  %v868 = vadd.f32 0.0, %v867
  %v869 = vpop.f32.mrb[0].mxu0
  %870 = vmatprep.mubr.bf16.mxu0 0
  %871 = vmatmul.mubr.bf16.gmra.mrb[0].mxu0 %v814
  %v872 = vpop.f32.mrb[0].mxu0
  %v873 = vadd.f32 0.0, %v872
  %v874 = vpop.f32.mrb[0].mxu0
  %v875 = vpop.f32.mrb[0].mxu0
  %v876 = vadd.f32 0.0, %v875
  %v877 = vpop.f32.mrb[0].mxu0
  %878 = vmatprep.mubr.bf16.mxu0 0
  %879 = vmatmul.mubr.bf16.gmra.mrb[0].mxu0 %v817
  %v880 = vpop.f32.mrb[0].mxu0
  %v881 = vadd.f32 0.0, %v880
  %v882 = vpop.f32.mrb[0].mxu0
  %v883 = vpop.f32.mrb[0].mxu0
  %v884 = vadd.f32 0.0, %v883
  %v885 = vpop.f32.mrb[0].mxu0
  %886 = vdwg.mxu0
  %v887 = vadd.f32 %v785, %v857
  %v888 = vadd.f32 %v786, %v860
  %v889 = vadd.f32 %v787, %v865
  %v890 = vadd.f32 %v788, %v868
  %v891 = vadd.f32 %v789, %v873
  %v892 = vadd.f32 %v790, %v876
  %v893 = vadd.f32 %v791, %v881
  %v894 = vadd.f32 %v792, %v884
  %vm895 = vsmask.f32 7424
  %v896 = vrot.slane %v538, 1
  %v897 = vor.u32 %v535, %v896
  %v898 = vrot.slane %v546, 1
  %v899 = vsel %vm895, %v897, %v898
  %v900 = vor.u32 %v543, %v898
  %v901 = vrot.slane %v555, 1
  %v902 = vsel %vm895, %v900, %v901
  %v903 = vor.u32 %v552, %v901
  %v904 = vrot.slane %v564, 1
  %v905 = vsel %vm895, %v903, %v904
  %v906 = vor.u32 %v561, %v904
  %vm908 = vcmask 1047552
  %vm909 = vmand %vm908, %vm895
  %v910 = vsel %vm909, %v906, 0
  %v911 = vld [vmem:[%s3 + $0xc] sm:$0x7]
  %v913 = vunpack.c.l.b16 %v911
  %v914 = vpack.c.b16 %v913, %v913
  %v916 = vshrl.u32 %v914, 16
  %v918 = vshll.u32 %v914, 16
  %v920 = vrot.slane %v918, 1
  %v921 = vor.u32 %v916, %v920
  %v923 = vsel %vm349, %v899, 0
  %v926 = vsel %vm349, %v902, 0
  %v929 = vsel %vm349, %v905, 0
  %v932 = vsel %vm349, %v910, 0
  %v935 = vand.u32 %v921, %v364
  %937 = vmatprep.subr.bf16.mxu0 0
  %938 = vmatpush1.bf16.msra.mxu0 %v935
  %939 = vmatprep.subr.bf16.mxu0 0
  %940 = vmatpush1.bf16.msra.mxu0 0
  %941 = vmatprep.subr.bf16.mxu0 0
  %942 = vmatpush1.bf16.msra.mxu0 0
  %943 = vmatprep.subr.bf16.mxu0 0
  %944 = vmatpush1.bf16.msra.mxu0 0
  %945 = vmatprep.subr.bf16.mxu0 0
  %946 = vmatpush1.bf16.msra.mxu0 0
  %947 = vmatprep.subr.bf16.mxu0 0
  %948 = vmatpush1.bf16.msra.mxu0 0
  %949 = vmatprep.subr.bf16.mxu0 0
  %950 = vmatpush1.bf16.msra.mxu0 0
  %951 = vmatprep.subr.bf16.mxu0 0
  %952 = vmatpush1.bf16.msra.mxu0 0
  %953 = vmatprep.subr.bf16.mxu0 0
  %954 = vmatpush1.bf16.msra.mxu0 0
  %955 = vmatprep.subr.bf16.mxu0 0
  %956 = vmatpush1.bf16.msra.mxu0 0
  %957 = vmatprep.subr.bf16.mxu0 0
  %958 = vmatpush1.bf16.msra.mxu0 0
  %959 = vmatprep.subr.bf16.mxu0 0
  %960 = vmatpush1.bf16.msra.mxu0 0
  %961 = vmatprep.subr.bf16.mxu0 0
  %962 = vmatpush1.bf16.msra.mxu0 0
  %963 = vmatprep.subr.bf16.mxu0 0
  %964 = vmatpush1.bf16.msra.mxu0 0
  %965 = vmatprep.subr.bf16.mxu0 0
  %966 = vmatpush1.bf16.msra.mxu0 0
  %967 = vmatprep.subr.bf16.mxu0 0
  %968 = vmatpush1.bf16.msra.mxu0 0
  %969 = vmatprep.mubr.bf16.mxu0 0
  %970 = vmatmul.mubr.bf16.gmra.mrb[0].mxu0 %v923
  %v971 = vpop.f32.mrb[0].mxu0
  %v972 = vadd.f32 0.0, %v971
  %v973 = vpop.f32.mrb[0].mxu0
  %v974 = vpop.f32.mrb[0].mxu0
  %v975 = vadd.f32 0.0, %v974
  %v976 = vpop.f32.mrb[0].mxu0
  %977 = vmatprep.mubr.bf16.mxu0 0
  %978 = vmatmul.mubr.bf16.gmra.mrb[0].mxu0 %v926
  %v979 = vpop.f32.mrb[0].mxu0
  %v980 = vadd.f32 0.0, %v979
  %v981 = vpop.f32.mrb[0].mxu0
  %v982 = vpop.f32.mrb[0].mxu0
  %v983 = vadd.f32 0.0, %v982
  %v984 = vpop.f32.mrb[0].mxu0
  %985 = vmatprep.mubr.bf16.mxu0 0
  %986 = vmatmul.mubr.bf16.gmra.mrb[0].mxu0 %v929
  %v987 = vpop.f32.mrb[0].mxu0
  %v988 = vadd.f32 0.0, %v987
  %v989 = vpop.f32.mrb[0].mxu0
  %v990 = vpop.f32.mrb[0].mxu0
  %v991 = vadd.f32 0.0, %v990
  %v992 = vpop.f32.mrb[0].mxu0
  %993 = vmatprep.mubr.bf16.mxu0 0
  %994 = vmatmul.mubr.bf16.gmra.mrb[0].mxu0 %v932
  %v995 = vpop.f32.mrb[0].mxu0
  %v996 = vadd.f32 0.0, %v995
  %v997 = vpop.f32.mrb[0].mxu0
  %v998 = vpop.f32.mrb[0].mxu0
  %v999 = vadd.f32 0.0, %v998
  %v1000 = vpop.f32.mrb[0].mxu0
  %1001 = vdwg.mxu0
  %v1002 = vadd.f32 %v887, %v972
  %v1003 = vadd.f32 %v888, %v975
  %v1004 = vadd.f32 %v889, %v980
  %v1005 = vadd.f32 %v890, %v983
  %v1006 = vadd.f32 %v891, %v988
  %v1007 = vadd.f32 %v892, %v991
  %v1008 = vadd.f32 %v893, %v996
  %v1009 = vadd.f32 %v894, %v999
  %v1010 = vrot.slane %v679, 3
  %v1011 = vrot.slane %v682, 4
  %v1012 = vor.u32 %v1010, %v1011
  %v1013 = vsel %vm271, %v296, %v1012
  %v1015 = vsel %vm309, %v1012, 0
  %v1016 = vld [vmem:[%s3 + $0xc] sm:$0x8]
  %v1017 = vld [vmem:[%s3 + $0x10] sm:$0x3]
  %v1020 = vunpack.c.l.b16 %v1016
  %v1021 = vunpack.c.l.b16 %v1017
  %v1022 = vpack.c.b16 %v1021, %v1020
  %v1023 = vrot.slane %v1022, 3
  %v1025 = vsel %vm349, %v1013, 0
  %v1028 = vsel %vm349, %v1015, 0
  %v1031 = vand.u32 %v1023, %v364
  %1033 = vmatprep.subr.bf16.mxu0 0
  %1034 = vmatpush1.bf16.msra.mxu0 %v1031
  %1035 = vmatprep.subr.bf16.mxu0 0
  %1036 = vmatpush1.bf16.msra.mxu0 0
  %1037 = vmatprep.subr.bf16.mxu0 0
  %1038 = vmatpush1.bf16.msra.mxu0 0
  %1039 = vmatprep.subr.bf16.mxu0 0
  %1040 = vmatpush1.bf16.msra.mxu0 0
  %1041 = vmatprep.subr.bf16.mxu0 0
  %1042 = vmatpush1.bf16.msra.mxu0 0
  %1043 = vmatprep.subr.bf16.mxu0 0
  %1044 = vmatpush1.bf16.msra.mxu0 0
  %1045 = vmatprep.subr.bf16.mxu0 0
  %1046 = vmatpush1.bf16.msra.mxu0 0
  %1047 = vmatprep.subr.bf16.mxu0 0
  %1048 = vmatpush1.bf16.msra.mxu0 0
  %1049 = vmatprep.subr.bf16.mxu0 0
  %1050 = vmatpush1.bf16.msra.mxu0 0
  %1051 = vmatprep.subr.bf16.mxu0 0
  %1052 = vmatpush1.bf16.msra.mxu0 0
  %1053 = vmatprep.subr.bf16.mxu0 0
  %1054 = vmatpush1.bf16.msra.mxu0 0
  %1055 = vmatprep.subr.bf16.mxu0 0
  %1056 = vmatpush1.bf16.msra.mxu0 0
  %1057 = vmatprep.subr.bf16.mxu0 0
  %1058 = vmatpush1.bf16.msra.mxu0 0
  %1059 = vmatprep.subr.bf16.mxu0 0
  %1060 = vmatpush1.bf16.msra.mxu0 0
  %1061 = vmatprep.subr.bf16.mxu0 0
  %1062 = vmatpush1.bf16.msra.mxu0 0
  %1063 = vmatprep.subr.bf16.mxu0 0
  %1064 = vmatpush1.bf16.msra.mxu0 0
  %1065 = vmatprep.mubr.bf16.mxu0 0
  %1066 = vmatmul.mubr.bf16.gmra.mrb[0].mxu0 %v437
  %v1067 = vpop.f32.mrb[0].mxu0
  %v1068 = vadd.f32 0.0, %v1067
  %v1069 = vpop.f32.mrb[0].mxu0
  %v1070 = vpop.f32.mrb[0].mxu0
  %v1071 = vadd.f32 0.0, %v1070
  %v1072 = vpop.f32.mrb[0].mxu0
  %1073 = vmatprep.mubr.bf16.mxu0 0
  %1074 = vmatmul.mubr.bf16.gmra.mrb[0].mxu0 %v440
  %v1075 = vpop.f32.mrb[0].mxu0
  %v1076 = vadd.f32 0.0, %v1075
  %v1077 = vpop.f32.mrb[0].mxu0
  %v1078 = vpop.f32.mrb[0].mxu0
  %v1079 = vadd.f32 0.0, %v1078
  %v1080 = vpop.f32.mrb[0].mxu0
  %1081 = vmatprep.mubr.bf16.mxu0 0
  %1082 = vmatmul.mubr.bf16.gmra.mrb[0].mxu0 %v1025
  %v1083 = vpop.f32.mrb[0].mxu0
  %v1084 = vadd.f32 0.0, %v1083
  %v1085 = vpop.f32.mrb[0].mxu0
  %v1086 = vpop.f32.mrb[0].mxu0
  %v1087 = vadd.f32 0.0, %v1086
  %v1088 = vpop.f32.mrb[0].mxu0
  %1089 = vmatprep.mubr.bf16.mxu0 0
  %1090 = vmatmul.mubr.bf16.gmra.mrb[0].mxu0 %v1028
  %v1091 = vpop.f32.mrb[0].mxu0
  %v1092 = vadd.f32 0.0, %v1091
  %v1093 = vpop.f32.mrb[0].mxu0
  %v1094 = vpop.f32.mrb[0].mxu0
  %v1095 = vadd.f32 0.0, %v1094
  %v1096 = vpop.f32.mrb[0].mxu0
  %1097 = vdwg.mxu0
  %v1098 = vadd.f32 %v1002, %v1068
  %v1099 = vadd.f32 %v1003, %v1071
  %v1100 = vadd.f32 %v1004, %v1076
  %v1101 = vadd.f32 %v1005, %v1079
  %v1102 = vadd.f32 %v1006, %v1084
  %v1103 = vadd.f32 %v1007, %v1087
  %v1104 = vadd.f32 %v1008, %v1092
  %v1105 = vadd.f32 %v1009, %v1095
  %v1106 = vpack.c.b16 %v796, %v796
  %v1108 = vsel %vm330, %v1106, 0
  %v1109 = vld [vmem:[%s3 + $0x10] sm:$0xe]
  %v1111 = vunpack.c.l.b16 %v1109
  %v1112 = vpack.c.b16 %v1111, %v1111
  %v1114 = vshrl.u32 %v1112, 16
  %v1116 = vrot.slane %v1114, 1
  %v1117 = vshll.u32 %v1112, 16
  %v1119 = vrot.slane %v1117, 2
  %v1120 = vor.u32 %v1116, %v1119
  %v1121 = vsel %vm349, %v1108, 0
  %v1124 = vand.u32 %v1120, %v364
  %1126 = vmatprep.subr.bf16.mxu0 0
  %1127 = vmatpush1.bf16.msra.mxu0 %v1124
  %1128 = vmatprep.subr.bf16.mxu0 0
  %1129 = vmatpush1.bf16.msra.mxu0 0
  %1130 = vmatprep.subr.bf16.mxu0 0
  %1131 = vmatpush1.bf16.msra.mxu0 0
  %1132 = vmatprep.subr.bf16.mxu0 0
  %1133 = vmatpush1.bf16.msra.mxu0 0
  %1134 = vmatprep.subr.bf16.mxu0 0
  %1135 = vmatpush1.bf16.msra.mxu0 0
  %1136 = vmatprep.subr.bf16.mxu0 0
  %1137 = vmatpush1.bf16.msra.mxu0 0
  %1138 = vmatprep.subr.bf16.mxu0 0
  %1139 = vmatpush1.bf16.msra.mxu0 0
  %1140 = vmatprep.subr.bf16.mxu0 0
  %1141 = vmatpush1.bf16.msra.mxu0 0
  %1142 = vmatprep.subr.bf16.mxu0 0
  %1143 = vmatpush1.bf16.msra.mxu0 0
  %1144 = vmatprep.subr.bf16.mxu0 0
  %1145 = vmatpush1.bf16.msra.mxu0 0
  %1146 = vmatprep.subr.bf16.mxu0 0
  %1147 = vmatpush1.bf16.msra.mxu0 0
  %1148 = vmatprep.subr.bf16.mxu0 0
  %1149 = vmatpush1.bf16.msra.mxu0 0
  %1150 = vmatprep.subr.bf16.mxu0 0
  %1151 = vmatpush1.bf16.msra.mxu0 0
  %1152 = vmatprep.subr.bf16.mxu0 0
  %1153 = vmatpush1.bf16.msra.mxu0 0
  %1154 = vmatprep.subr.bf16.mxu0 0
  %1155 = vmatpush1.bf16.msra.mxu0 0
  %1156 = vmatprep.subr.bf16.mxu0 0
  %1157 = vmatpush1.bf16.msra.mxu0 0
  %1158 = vmatprep.mubr.bf16.mxu0 0
  %1159 = vmatmul.mubr.bf16.gmra.mrb[0].mxu0 %v353
  %v1160 = vpop.f32.mrb[0].mxu0
  %v1161 = vadd.f32 0.0, %v1160
  %v1162 = vpop.f32.mrb[0].mxu0
  %v1163 = vpop.f32.mrb[0].mxu0
  %v1164 = vadd.f32 0.0, %v1163
  %v1165 = vpop.f32.mrb[0].mxu0
  %1166 = vmatprep.mubr.bf16.mxu0 0
  %1167 = vmatmul.mubr.bf16.gmra.mrb[0].mxu0 %v356
  %v1168 = vpop.f32.mrb[0].mxu0
  %v1169 = vadd.f32 0.0, %v1168
  %v1170 = vpop.f32.mrb[0].mxu0
  %v1171 = vpop.f32.mrb[0].mxu0
  %v1172 = vadd.f32 0.0, %v1171
  %v1173 = vpop.f32.mrb[0].mxu0
  %1174 = vmatprep.mubr.bf16.mxu0 0
  %1175 = vmatmul.mubr.bf16.gmra.mrb[0].mxu0 %v359
  %v1176 = vpop.f32.mrb[0].mxu0
  %v1177 = vadd.f32 0.0, %v1176
  %v1178 = vpop.f32.mrb[0].mxu0
  %v1179 = vpop.f32.mrb[0].mxu0
  %v1180 = vadd.f32 0.0, %v1179
  %v1181 = vpop.f32.mrb[0].mxu0
  %1182 = vmatprep.mubr.bf16.mxu0 0
  %1183 = vmatmul.mubr.bf16.gmra.mrb[0].mxu0 %v1121
  %v1184 = vpop.f32.mrb[0].mxu0
  %v1185 = vadd.f32 0.0, %v1184
  %v1186 = vpop.f32.mrb[0].mxu0
  %v1187 = vpop.f32.mrb[0].mxu0
  %v1188 = vadd.f32 0.0, %v1187
  %v1189 = vpop.f32.mrb[0].mxu0
  %1190 = vdwg.mxu0
  %v1191 = vadd.f32 %v1098, %v1161
  %v1192 = vadd.f32 %v1099, %v1164
  %v1193 = vadd.f32 %v1100, %v1169
  %v1194 = vadd.f32 %v1101, %v1172
  %v1195 = vadd.f32 %v1102, %v1177
  %v1196 = vadd.f32 %v1103, %v1180
  %v1197 = vadd.f32 %v1104, %v1185
  %v1198 = vadd.f32 %v1105, %v1188
  %v1199 = vpack.c.b16 %v523, %v522
  %v1200 = vpack.c.b16 %v525, %v524
  %v1201 = vpack.c.b16 %v527, %v526
  %v1202 = vpack.c.b16 %v528, %v528
  %v1204 = vshrl.u32 %v1199, 16
  %v1206 = vshll.u32 %v1199, 16
  %v1208 = vrot.slane %v1206, 1
  %v1209 = vor.u32 %v1204, %v1208
  %v1211 = vshll.u32 %v1200, 16
  %v1213 = vrot.slane %v1211, 1
  %v1214 = vsel %vm895, %v1209, %v1213
  %v1215 = vshrl.u32 %v1200, 16
  %v1217 = vor.u32 %v1215, %v1213
  %v1219 = vshll.u32 %v1201, 16
  %v1221 = vrot.slane %v1219, 1
  %v1222 = vsel %vm895, %v1217, %v1221
  %v1223 = vshrl.u32 %v1201, 16
  %v1225 = vor.u32 %v1223, %v1221
  %v1227 = vshll.u32 %v1202, 16
  %v1229 = vrot.slane %v1227, 1
  %v1230 = vsel %vm895, %v1225, %v1229
  %v1231 = vshrl.u32 %v1202, 16
  %v1233 = vor.u32 %v1231, %v1229
  %v1235 = vsel %vm571, %v1233, 0
  %v1236 = vld [vmem:[%s3 + $0x14] sm:$0x7]
  %v1238 = vsel %vm349, %v1214, 0
  %v1241 = vsel %vm349, %v1222, 0
  %v1244 = vsel %vm349, %v1230, 0
  %v1247 = vsel %vm349, %v1235, 0
  %v1250 = vand.u32 %v1236, %v364
  %1252 = vmatprep.subr.bf16.mxu0 0
  %1253 = vmatpush1.bf16.msra.mxu0 %v1250
  %1254 = vmatprep.subr.bf16.mxu0 0
  %1255 = vmatpush1.bf16.msra.mxu0 0
  %1256 = vmatprep.subr.bf16.mxu0 0
  %1257 = vmatpush1.bf16.msra.mxu0 0
  %1258 = vmatprep.subr.bf16.mxu0 0
  %1259 = vmatpush1.bf16.msra.mxu0 0
  %1260 = vmatprep.subr.bf16.mxu0 0
  %1261 = vmatpush1.bf16.msra.mxu0 0
  %1262 = vmatprep.subr.bf16.mxu0 0
  %1263 = vmatpush1.bf16.msra.mxu0 0
  %1264 = vmatprep.subr.bf16.mxu0 0
  %1265 = vmatpush1.bf16.msra.mxu0 0
  %1266 = vmatprep.subr.bf16.mxu0 0
  %1267 = vmatpush1.bf16.msra.mxu0 0
  %1268 = vmatprep.subr.bf16.mxu0 0
  %1269 = vmatpush1.bf16.msra.mxu0 0
  %1270 = vmatprep.subr.bf16.mxu0 0
  %1271 = vmatpush1.bf16.msra.mxu0 0
  %1272 = vmatprep.subr.bf16.mxu0 0
  %1273 = vmatpush1.bf16.msra.mxu0 0
  %1274 = vmatprep.subr.bf16.mxu0 0
  %1275 = vmatpush1.bf16.msra.mxu0 0
  %1276 = vmatprep.subr.bf16.mxu0 0
  %1277 = vmatpush1.bf16.msra.mxu0 0
  %1278 = vmatprep.subr.bf16.mxu0 0
  %1279 = vmatpush1.bf16.msra.mxu0 0
  %1280 = vmatprep.subr.bf16.mxu0 0
  %1281 = vmatpush1.bf16.msra.mxu0 0
  %1282 = vmatprep.subr.bf16.mxu0 0
  %1283 = vmatpush1.bf16.msra.mxu0 0
  %1284 = vmatprep.mubr.bf16.mxu0 0
  %1285 = vmatmul.mubr.bf16.gmra.mrb[0].mxu0 %v1238
  %v1286 = vpop.f32.mrb[0].mxu0
  %v1287 = vadd.f32 0.0, %v1286
  %v1288 = vpop.f32.mrb[0].mxu0
  %v1289 = vpop.f32.mrb[0].mxu0
  %v1290 = vadd.f32 0.0, %v1289
  %v1291 = vpop.f32.mrb[0].mxu0
  %1292 = vmatprep.mubr.bf16.mxu0 0
  %1293 = vmatmul.mubr.bf16.gmra.mrb[0].mxu0 %v1241
  %v1294 = vpop.f32.mrb[0].mxu0
  %v1295 = vadd.f32 0.0, %v1294
  %v1296 = vpop.f32.mrb[0].mxu0
  %v1297 = vpop.f32.mrb[0].mxu0
  %v1298 = vadd.f32 0.0, %v1297
  %v1299 = vpop.f32.mrb[0].mxu0
  %1300 = vmatprep.mubr.bf16.mxu0 0
  %1301 = vmatmul.mubr.bf16.gmra.mrb[0].mxu0 %v1244
  %v1302 = vpop.f32.mrb[0].mxu0
  %v1303 = vadd.f32 0.0, %v1302
  %v1304 = vpop.f32.mrb[0].mxu0
  %v1305 = vpop.f32.mrb[0].mxu0
  %v1306 = vadd.f32 0.0, %v1305
  %v1307 = vpop.f32.mrb[0].mxu0
  %1308 = vmatprep.mubr.bf16.mxu0 0
  %1309 = vmatmul.mubr.bf16.gmra.mrb[0].mxu0 %v1247
  %v1310 = vpop.f32.mrb[0].mxu0
  %v1311 = vadd.f32 0.0, %v1310
  %v1312 = vpop.f32.mrb[0].mxu0
  %v1313 = vpop.f32.mrb[0].mxu0
  %v1314 = vadd.f32 0.0, %v1313
  %v1315 = vpop.f32.mrb[0].mxu0
  %1316 = vdwg.mxu0
  %v1317 = vadd.f32 %v1191, %v1287
  %v1318 = vadd.f32 %v1192, %v1290
  %v1319 = vadd.f32 %v1193, %v1295
  %v1320 = vadd.f32 %v1194, %v1298
  %v1321 = vadd.f32 %v1195, %v1303
  %v1322 = vadd.f32 %v1196, %v1306
  %v1323 = vadd.f32 %v1197, %v1311
  %v1324 = vadd.f32 %v1198, %v1314
  %v1325 = vld [vmem:[%s4] sm:$0x1]
  %v1327 = vlaneseq
  %v1328 = vshrl.u32 %v1327, 7
  %v1329 = vsub.s32 0, %v1328
  %v1330 = vrot.slane %v1325, %v1329
  %v1332 = vadd.f32 %v1317, %v1330
  %v1333 = vadd.f32 %v1318, %v1330
  %v1334 = vadd.f32 %v1319, %v1330
  %v1335 = vadd.f32 %v1320, %v1330
  %v1336 = vadd.f32 %v1321, %v1330
  %v1337 = vadd.f32 %v1322, %v1330
  %v1338 = vadd.f32 %v1323, %v1330
  %v1339 = vadd.f32 %v1324, %v1330
  %vm1340 = vcmp.ge.f32.partialorder %v1332, 0.0
  %vm1341 = vcmp.ge.f32.partialorder %v1333, 0.0
  %vm1342 = vcmp.ge.f32.partialorder %v1334, 0.0
  %vm1343 = vcmp.ge.f32.partialorder %v1335, 0.0
  %vm1344 = vcmp.ge.f32.partialorder %v1336, 0.0
  %vm1345 = vcmp.ge.f32.partialorder %v1337, 0.0
  %vm1346 = vcmp.ge.f32.partialorder %v1338, 0.0
  %vm1347 = vcmp.ge.f32.partialorder %v1339, 0.0
  %v1348 = vmul.f32 %v1332, 0.1
  %v1349 = vmul.f32 %v1333, 0.1
  %v1350 = vmul.f32 %v1334, 0.1
  %v1351 = vmul.f32 %v1335, 0.1
  %v1352 = vmul.f32 %v1336, 0.1
  %v1353 = vmul.f32 %v1337, 0.1
  %v1354 = vmul.f32 %v1338, 0.1
  %v1355 = vmul.f32 %v1339, 0.1
  %v1356 = vsel %vm1340, %v1332, %v1348
  %v1357 = vsel %vm1341, %v1333, %v1349
  %v1358 = vsel %vm1342, %v1334, %v1350
  %v1359 = vsel %vm1343, %v1335, %v1351
  %v1360 = vsel %vm1344, %v1336, %v1352
  %v1361 = vsel %vm1345, %v1337, %v1353
  %v1362 = vsel %vm1346, %v1338, %v1354
  %v1363 = vsel %vm1347, %v1339, %v1355
  %v1364 = vpack.c.bf16 %v1357, %v1356
  %v1365 = vpack.c.bf16 %v1359, %v1358
  %v1366 = vpack.c.bf16 %v1361, %v1360
  %v1367 = vpack.c.bf16 %v1363, %v1362
  %v1372 = vunpack.c.l.b16 %v1364
  %v1373 = vunpack.c.h.b16 %v1364
  %v1374 = vunpack.c.l.b16 %v1365
  %v1375 = vunpack.c.h.b16 %v1365
  %v1376 = vunpack.c.l.b16 %v1366
  %v1377 = vunpack.c.h.b16 %v1366
  %v1378 = vunpack.c.l.b16 %v1367
  %v1379 = vunpack.c.h.b16 %v1367
  %v1380 = vpack.c.b16 %v1372, %v1372
  %v1381 = vpack.c.b16 %v1373, %v1373
  %v1382 = vpack.c.b16 %v1374, %v1374
  %v1383 = vpack.c.b16 %v1375, %v1375
  %v1384 = vpack.c.b16 %v1376, %v1376
  %v1385 = vpack.c.b16 %v1377, %v1377
  %v1386 = vpack.c.b16 %v1378, %v1378
  %v1387 = vpack.c.b16 %v1379, %v1379
  %vm1396 = vcmask 52224
  %1397 = vst.msk [vmem:[%s5] sm:$0xf] %vm1396, %v1380
  %1398 = vst.msk [vmem:[%s5 + $0x4] sm:$0xf] %vm1396, %v1381
  %1399 = vst.msk [vmem:[%s5 + $0x8] sm:$0xf] %vm1396, %v1382
  %1400 = vst.msk [vmem:[%s5 + $0xc] sm:$0xf] %vm1396, %v1383
  %1401 = vst.msk [vmem:[%s5 + $0x10] sm:$0xf] %vm1396, %v1384
  %1402 = vst.msk [vmem:[%s5 + $0x14] sm:$0xf] %vm1396, %v1385
  %1403 = vst.msk [vmem:[%s5 + $0x18] sm:$0xf] %vm1396, %v1386
  %1404 = vst.msk [vmem:[%s5 + $0x1c] sm:$0xf] %vm1396, %v1387
  // Predicated region
  $region22: #{tpu_custom_call.1} parent=0 // pred_check
    _
  $region23: #{tpu_custom_call.1} parent=0 // pred_check_branch
    %1406 = sbr.rel (0) target = $region25
  $region24: #{tpu_custom_call.1} parent=0 // pred_region
    _
  $region25: #{tpu_custom_call.1} parent=0 // pred_fallthru
    _
  // Predicated region
  $region26: #{tpu_custom_call.1} parent=0 // pred_check
    _
  $region27: #{tpu_custom_call.1} parent=0 // pred_check_branch
    %1408 = sbr.rel (0) target = $region29
  $region28: #{tpu_custom_call.1} parent=0 // pred_region
    _
  $region29: #{tpu_custom_call.1} parent=0 // pred_fallthru
    _

</llo_original>
